<compile_context>
chip_gen: v6e
topology: v6e:2x2x1
jax: 0.10.0
libtpu: 0.0.40
codegen_flags: <defaults>
</compile_context>

<pallas_src>
import numpy as np
import jax
import jax.numpy as jnp
from jax import lax
from jax.experimental import pallas as pl
from jax.experimental.pallas import tpu as pltpu

SIGMA = 0.1          # sigma / sigma_bias / sigma_rigid / sigma_flexible / ...
EPS = 1e-10
SHIFTS_DELTA = 10
SHIFTS = np.arange(-SHIFTS_DELTA, SHIFTS_DELTA + 1)   # 21 shifts


# ---------------------------------------------------------------------------
# reference math helpers (pure jnp; used for the correctness check)
# ---------------------------------------------------------------------------
def rotate3D(x, y, z, rx, ry, rz, px, py, pz):
    # TODO(synk): original rotate3D helper is not in the provided snippet;
    # standard X -> Y -> Z elementary rotations about pivot (px, py, pz) assumed.
    x1, y1, z1 = x - px, y - py, z - pz
    cx, sx = jnp.cos(rx), jnp.sin(rx)
    y2 = y1 * cx - z1 * sx
    z2 = y1 * sx + z1 * cx
    x2 = x1
    cy, sy = jnp.cos(ry), jnp.sin(ry)
    x3 = x2 * cy + z2 * sy
    z3 = -x2 * sy + z2 * cy
    y3 = y2
    cz, sz = jnp.cos(rz), jnp.sin(rz)
    x4 = x3 * cz - y3 * sz
    y4 = x3 * sz + y3 * cz
    z4 = z3
    return x4 + px, y4 + py, z4 + pz


def trajectory_length(x, y, z):
    dx = x[1:, :] - x[:-1, :]
    dy = y[1:, :] - y[:-1, :]
    dz = z[1:, :] - z[:-1, :]
    return jnp.sum(jnp.sqrt(dx * dx + dy * dy + dz * dz), keepdims=True)  # (1,1)


def forward_math(x_rec, y_rec, z_rec, w_rec, M,
                 xr_p, yr_p, zr_p, xf_p, yf_p, zf_p,
                 rx_p, ry_p, rz_p,
                 prx_p, pry_p, prz_p, logq):
    """Exact forward-pass math of ModelFlexibleObject (pure-JAX reference)."""
    T, n = x_rec.shape

    def mix(a):  # temporal smoothing: (T, T) mixing matrix @ (T, k)
        return jnp.dot(M, a, preferred_element_type=jnp.float32)

    # mix() over a length-1 time axis reduces to identity (softmax weights sum to 1)
    p_rot_x = SIGMA * prx_p            # (1, 1)
    p_rot_y = SIGMA * pry_p
    p_rot_z = SIGMA * prz_p

    # global z normalization
    sumw_all = jnp.sum(w_rec, keepdims=True)
    sumwz_all = jnp.sum(w_rec * z_rec, keepdims=True)
    sumwz2_all = jnp.sum(w_rec * z_rec * z_rec, keepdims=True)
    mu_z = sumwz_all / (sumw_all + EPS)
    sigma2_z = sumwz2_all / (sumw_all + EPS) - mu_z * mu_z
    z_rec = (z_rec - mu_z) / jnp.sqrt(sigma2_z + EPS)
    q_z0 = jnp.exp(logq)               # (1, 1)
    z_rec = q_z0 * z_rec

    # per-node rigid centroids
    sumw = jnp.sum(w_rec, axis=0, keepdims=True)              # (1, n)
    sumwx = jnp.sum(w_rec * x_rec, axis=0, keepdims=True)
    sumwy = jnp.sum(w_rec * y_rec, axis=0, keepdims=True)
    sumwz = jnp.sum(w_rec * z_rec, axis=0, keepdims=True)
    x_rigid0 = sumwx / (sumw + 1e-10)
    y_rigid0 = sumwy / (sumw + 1e-10)
    z_rigid0 = sumwz / (sumw + 1e-10)

    # per-frame bias init
    w_row = jnp.sum(w_rec, axis=1, keepdims=True)              # (T, 1)
    bias_x0 = jnp.sum((x_rec - x_rigid0) * w_rec, axis=1, keepdims=True) / (w_row + 1e-10)
    bias_y0 = jnp.sum((y_rec - y_rigid0) * w_rec, axis=1, keepdims=True) / (w_row + 1e-10)
    bias_z0 = jnp.sum((z_rec - z_rigid0) * w_rec, axis=1, keepdims=True) / (w_row + 1e-10)

    x_rigid = SIGMA * xr_p + x_rigid0                          # (1, n)
    y_rigid = SIGMA * yr_p + y_rigid0
    z_rigid = SIGMA * zr_p + z_rigid0

    x_flexible0 = x_rec - (x_rigid0 + bias_x0)                 # (T, n)
    y_flexible0 = y_rec - (y_rigid0 + bias_y0)
    z_flexible0 = z_rec - (z_rigid0 + bias_z0)
    x0_flexible = SIGMA * xf_p + x_flexible0
    y0_flexible = SIGMA * yf_p + y_flexible0
    z0_flexible = SIGMA * zf_p + z_flexible0

    rotations_x = SIGMA * mix(rx_p)                            # (T, 1)
    rotations_y = SIGMA * mix(ry_p)
    rotations_z = SIGMA * mix(rz_p)

    x_flexible = x_rigid + mix(x0_flexible)                    # (T, n)
    y_flexible = y_rigid + mix(y0_flexible)
    z_flexible = z_rigid + mix(z0_flexible)

    # bias_x/y/z mixing + bias() calls of the original forward never reach its
    # returned outputs -> omitted from the reference as well (dead code).
    x_rr, y_rr, z_rr = rotate3D(x_rigid, y_rigid, z_rigid,
                                rotations_x, rotations_y, rotations_z,
                                p_rot_x, p_rot_y, p_rot_z)
    x_fr, y_fr, z_fr = rotate3D(x_flexible, y_flexible, z_flexible,
                                rotations_x, rotations_y, rotations_z,
                                p_rot_x, p_rot_y, p_rot_z)
    x_rrb, y_rrb, z_rrb = rotate3D(x_rr, y_rr, z_rr,
                                   rotations_x, rotations_y, rotations_z,
                                   p_rot_x, p_rot_y, p_rot_z)
    x_frb, y_frb, z_frb = rotate3D(x_fr, y_fr, z_fr,
                                   rotations_x, rotations_y, rotations_z,
                                   p_rot_x, p_rot_y, p_rot_z)

    e_reg = 1.0 * trajectory_length(x_frb, y_frb, z_frb) / (T * n)   # (1, 1)
    return x_frb, y_frb, z_frb, x_rrb, y_rrb, z_rrb, e_reg


# ---------------------------------------------------------------------------
# mixing matrix (softmax over 21 shifts @ static shift-selection constant)
# ---------------------------------------------------------------------------
def _shift_matrices_flat(T):
    # TODO(synk): mix_shifts boundary handling assumed to be index clamping
    # (replicate edges); each shift matrix S_k maps frame t -> clip(t+shift_k).
    S = np.zeros((len(SHIFTS), T * T), dtype=np.float32)
    for k, sh in enumerate(SHIFTS):
        for t in range(T):
            s = int(np.clip(t + sh, 0, T - 1))
            S[k, t * T + s] += 1.0
    return S


def build_mix_matrix(w_mix_param, T):
    w = jax.nn.softmax(w_mix_param, axis=1)                 # (1, 21)
    S = jnp.asarray(_shift_matrices_flat(T))                # (21, T*T) static
    return jnp.dot(w, S).reshape(T, T)                      # (T, T)


# ---------------------------------------------------------------------------
# Pallas kernel (single grid-less call, everything in VMEM, no packing)
# ---------------------------------------------------------------------------
def _model_kernel(xr_ref, yr_ref, zr_ref, wr_ref, m_ref, rot3_ref,
                  xrig_ref, yrig_ref, zrig_ref,
                  xfp_ref, yfp_ref, zfp_ref,
                  prx_ref, pry_ref, prz_ref, logq_ref,
                  oxf_ref, oyf_ref, ozf_ref, oxr_ref, oyr_ref, ozr_ref,
                  ereg_ref):
    T, n = xr_ref.shape

    x_rec = xr_ref[...]
    y_rec = yr_ref[...]
    z_raw = zr_ref[...]
    w_rec = wr_ref[...]
    M = m_ref[...]                               # (T, T)
    rot3 = rot3_ref[...]                         # (T, 3) rotation params x|y|z

    # mix() of a length-1 time axis is the identity (softmax weights sum to 1)
    p_rot_x = SIGMA * prx_ref[...]               # (1, 1)
    p_rot_y = SIGMA * pry_ref[...]
    p_rot_z = SIGMA * prz_ref[...]
    q_z0 = jnp.exp(logq_ref[...])                # (1, 1)   1 EUP exp

    # ---- per-node (axis-0 / sublane) weighted sums ---------------------------
    wz = w_rec * z_raw
    sumw_c = jnp.sum(w_rec, axis=0, keepdims=True)              # (1, n)
    sumwx_c = jnp.sum(w_rec * x_rec, axis=0, keepdims=True)
    sumwy_c = jnp.sum(w_rec * y_rec, axis=0, keepdims=True)
    sumwz_c = jnp.sum(wz, axis=0, keepdims=True)
    sumwz2_c = jnp.sum(wz * z_raw, axis=0, keepdims=True)

    # ---- global z normalization (reuse per-node partials) --------------------
    sumw_all = jnp.sum(sumw_c, axis=1, keepdims=True)           # (1, 1)
    sumwz_all = jnp.sum(sumwz_c, axis=1, keepdims=True)
    sumwz2_all = jnp.sum(sumwz2_c, axis=1, keepdims=True)
    inv_sw_all = 1.0 / (sumw_all + EPS)                         # 1 divide
    mu_z = sumwz_all * inv_sw_all
    sigma2_z = sumwz2_all * inv_sw_all - mu_z * mu_z
    z_scale = q_z0 * lax.rsqrt(sigma2_z + EPS)                  # rsqrt, no sqrt+div
    z_rec = z_scale * (z_raw - mu_z)                            # normalized z

    # ---- per-node rigid centroids (one shared reciprocal) --------------------
    inv_sumw_c = 1.0 / (sumw_c + EPS)                           # 1 divide for 3 centroids
    x_rigid0 = sumwx_c * inv_sumw_c                             # (1, n)
    y_rigid0 = sumwy_c * inv_sumw_c
    # sum(w * z_norm) = z_scale * (sum(w*z_raw) - mu_z * sum(w))  (exact algebra)
    z_rigid0 = z_scale * (sumwz_c - mu_z * sumw_c) * inv_sumw_c

    # ---- per-frame (axis-1 / lane) bias init (one shared reciprocal) ---------
    w_row = jnp.sum(w_rec, axis=1, keepdims=True)               # (T, 1)
    inv_wrow = 1.0 / (w_row + EPS)                              # 1 divide for 3 biases
    bias_x0 = jnp.sum((x_rec - x_rigid0) * w_rec, axis=1, keepdims=True) * inv_wrow
    bias_y0 = jnp.sum((y_rec - y_rigid0) * w_rec, axis=1, keepdims=True) * inv_wrow
    bias_z0 = jnp.sum((z_rec - z_rigid0) * w_rec, axis=1, keepdims=True) * inv_wrow

    x_rigid = SIGMA * xrig_ref[...] + x_rigid0                  # (1, n)
    y_rigid = SIGMA * yrig_ref[...] + y_rigid0
    z_rigid = SIGMA * zrig_ref[...] + z_rigid0

    x0_flex = SIGMA * xfp_ref[...] + (x_rec - (x_rigid0 + bias_x0))   # (T, n)
    y0_flex = SIGMA * yfp_ref[...] + (y_rec - (y_rigid0 + bias_y0))
    z0_flex = SIGMA * zfp_ref[...] + (z_rec - (z_rigid0 + bias_z0))

    # NOTE: bias_x/y/z mixing and the bias() call results of the original
    # forward never reach the returned tensors -> dead code, dropped.

    # ---- temporal mixing on the MXU (per-array dots, lane-aligned results) ---
    angles = SIGMA * jnp.dot(M, rot3, preferred_element_type=jnp.float32)       # (T, 3)
    x_flex = x_rigid + jnp.dot(M, x0_flex, preferred_element_type=jnp.float32)  # (T, n)
    y_flex = y_rigid + jnp.dot(M, y0_flex, preferred_element_type=jnp.float32)
    z_flex = z_rigid + jnp.dot(M, z0_flex, preferred_element_type=jnp.float32)

    # ---- double rotation about the pivot: trig once on packed (T,3) angles ---
    ca = jnp.cos(angles)                         # 2 transcendental passes
    sa = jnp.sin(angles)                         # instead of 6
    cx, cy, cz = ca[:, 0:1], ca[:, 1:2], ca[:, 2:3]
    sx, sy, sz = sa[:, 0:1], sa[:, 1:2], sa[:, 2:3]
    # R = Rz @ Ry @ Rx (same X -> Y -> Z elementary composition as rotate3D)
    r00 = cz * cy
    r01 = cz * sy * sx - sz * cx
    r02 = cz * sy * cx + sz * sx
    r10 = sz * cy
    r11 = sz * sy * sx + cz * cx
    r12 = sz * sy * cx - cz * sx
    r20 = -sy
    r21 = cy * sx
    r22 = cy * cx
    # R2 = R @ R  (rotate3D applied twice with identical angles/pivot)
    q00 = r00 * r00 + r01 * r10 + r02 * r20
    q01 = r00 * r01 + r01 * r11 + r02 * r21
    q02 = r00 * r02 + r01 * r12 + r02 * r22
    q10 = r10 * r00 + r11 * r10 + r12 * r20
    q11 = r10 * r01 + r11 * r11 + r12 * r21
    q12 = r10 * r02 + r11 * r12 + r12 * r22
    q20 = r20 * r00 + r21 * r10 + r22 * r20
    q21 = r20 * r01 + r21 * r11 + r22 * r21
    q22 = r20 * r02 + r21 * r12 + r22 * r22

    # hoisted lane-broadcasts (JAX does not CSE broadcast_in_dim; reuse for
    # both the flexible and the rigid point sets)
    bshape = (T, n)
    q00b = jnp.broadcast_to(q00, bshape)
    q01b = jnp.broadcast_to(q01, bshape)
    q02b = jnp.broadcast_to(q02, bshape)
    q10b = jnp.broadcast_to(q10, bshape)
    q11b = jnp.broadcast_to(q11, bshape)
    q12b = jnp.broadcast_to(q12, bshape)
    q20b = jnp.broadcast_to(q20, bshape)
    q21b = jnp.broadcast_to(q21, bshape)
    q22b = jnp.broadcast_to(q22, bshape)

    def rot_twice(x1, y1, z1):                   # pivot-centered (T, n) inputs
        xo = q00b * x1 + q01b * y1 + q02b * z1 + p_rot_x
        yo = q10b * x1 + q11b * y1 + q12b * z1 + p_rot_y
        zo = q20b * x1 + q21b * y1 + q22b * z1 + p_rot_z
        return xo, yo, zo

    x_frb, y_frb, z_frb = rot_twice(x_flex - p_rot_x,
                                    y_flex - p_rot_y,
                                    z_flex - p_rot_z)
    x_rrb, y_rrb, z_rrb = rot_twice(jnp.broadcast_to(x_rigid - p_rot_x, bshape),
                                    jnp.broadcast_to(y_rigid - p_rot_y, bshape),
                                    jnp.broadcast_to(z_rigid - p_rot_z, bshape))

    # ---- direct (unsliced) writebacks -----------------------------------------
    oxf_ref[...] = x_frb
    oyf_ref[...] = y_frb
    ozf_ref[...] = z_frb
    oxr_ref[...] = x_rrb
    oyr_ref[...] = y_rrb
    ozr_ref[...] = z_rrb

    # scalar regularizer; /(T*n) folded into a constant multiply
    dx = x_frb[1:, :] - x_frb[:-1, :]
    dy = y_frb[1:, :] - y_frb[:-1, :]
    dz = z_frb[1:, :] - z_frb[:-1, :]
    traj = jnp.sum(jnp.sqrt(dx * dx + dy * dy + dz * dz), keepdims=True)  # (1, 1)
    ereg_ref[...] = traj * (1.0 / (T * n))


# ---------------------------------------------------------------------------
# wrapper: one grid-less pallas_call, separate VMEM refs, no output slicing
# ---------------------------------------------------------------------------
@jax.jit
def model_forward_pallas(x_rec, y_rec, z_rec, w_rec, params):
    T, n = x_rec.shape
    M = build_mix_matrix(params["w_mix"], T)                     # (T, T)
    rot3 = jnp.concatenate([params["rotations_x"], params["rotations_y"],
                            params["rotations_z"]], axis=1)      # (T, 3)

    vmem = pl.BlockSpec(memory_space=pltpu.MemorySpace.VMEM)
    out_shape = tuple(jax.ShapeDtypeStruct((T, n), jnp.float32) for _ in range(6)) \
        + (jax.ShapeDtypeStruct((1, 1), jnp.float32),)

    return pl.pallas_call(
        _model_kernel,
        out_shape=out_shape,
        in_specs=[vmem] * 16,
        out_specs=tuple([vmem] * 7),
    )(x_rec, y_rec, z_rec, w_rec, M, rot3,
      params["x_rigid"], params["y_rigid"], params["z_rigid"],
      params["x_flexible"], params["y_flexible"], params["z_flexible"],
      params["p_rotations_x"], params["p_rotations_y"], params["p_rotations_z"],
      params["logq_z0"])


# ---------------------------------------------------------------------------
# deterministic parameter init (shapes from ModelFlexibleObject.__init__)
# ---------------------------------------------------------------------------
def init_params(key, T, n, n_shifts=len(SHIFTS)):
    shapes = {
        "x_rigid": (1, n), "y_rigid": (1, n), "z_rigid": (1, n),
        "x_flexible": (T, n), "y_flexible": (T, n), "z_flexible": (T, n),
        "bias_x": (T, 1), "bias_y": (T, 1), "bias_z": (T, 1),
        "rotations_x": (T, 1), "rotations_y": (T, 1), "rotations_z": (T, 1),
        "p_rotations_x": (1, 1), "p_rotations_y": (1, 1), "p_rotations_z": (1, 1),
        "w_mix": (1, n_shifts),
        "logq_z0": (1, 1),
    }
    names = sorted(shapes)
    keys = jax.random.split(key, len(names))
    return {name: 0.1 * jax.random.normal(k, shapes[name], dtype=jnp.float32)
            for name, k in zip(names, keys)}


if __name__ == "__main__":
    T, n = 8, 16
    key = jax.random.PRNGKey(0)
    k1, k2, k3, k4, kp = jax.random.split(key, 5)
    x_rec = jax.random.normal(k1, (T, n), dtype=jnp.float32)
    y_rec = jax.random.normal(k2, (T, n), dtype=jnp.float32)
    z_rec = jax.random.normal(k3, (T, n), dtype=jnp.float32)
    w_rec = jax.nn.sigmoid(jax.random.normal(k4, (T, n), dtype=jnp.float32))
    # use_z_rec exists in data_for_init but is unused by forward()
    params = init_params(kp, T, n)

    outs = jax.block_until_ready(model_forward_pallas(x_rec, y_rec, z_rec, w_rec, params))

    # pure-JAX reference check (original un-fused math, no Pallas)
    M_ref = build_mix_matrix(params["w_mix"], T)
    ref = forward_math(
        x_rec, y_rec, z_rec, w_rec, M_ref,
        params["x_rigid"], params["y_rigid"], params["z_rigid"],
        params["x_flexible"], params["y_flexible"], params["z_flexible"],
        params["rotations_x"], params["rotations_y"], params["rotations_z"],
        params["p_rotations_x"], params["p_rotations_y"], params["p_rotations_z"],
        params["logq_z0"],
    )
    for o, r in zip(outs, ref):
        np.testing.assert_allclose(np.asarray(o), np.asarray(r), rtol=1e-4, atol=1e-4)

    print("KERNEL_OK")
</pallas_src>

<mosaic_0001>
module attributes {stable_mosaic.version = 11 : i64} {
  func.func @_model_kernel(%arg0: memref<8x16xf32, #tpu.memory_space<vmem>>, %arg1: memref<8x16xf32, #tpu.memory_space<vmem>>, %arg2: memref<8x16xf32, #tpu.memory_space<vmem>>, %arg3: memref<8x16xf32, #tpu.memory_space<vmem>>, %arg4: memref<8x8xf32, #tpu.memory_space<vmem>>, %arg5: memref<8x3xf32, #tpu.memory_space<vmem>>, %arg6: memref<1x16xf32, #tpu.memory_space<vmem>>, %arg7: memref<1x16xf32, #tpu.memory_space<vmem>>, %arg8: memref<1x16xf32, #tpu.memory_space<vmem>>, %arg9: memref<8x16xf32, #tpu.memory_space<vmem>>, %arg10: memref<8x16xf32, #tpu.memory_space<vmem>>, %arg11: memref<8x16xf32, #tpu.memory_space<vmem>>, %arg12: memref<1x1xf32, #tpu.memory_space<vmem>>, %arg13: memref<1x1xf32, #tpu.memory_space<vmem>>, %arg14: memref<1x1xf32, #tpu.memory_space<vmem>>, %arg15: memref<1x1xf32, #tpu.memory_space<vmem>>, %arg16: memref<8x16xf32, #tpu.memory_space<vmem>>, %arg17: memref<8x16xf32, #tpu.memory_space<vmem>>, %arg18: memref<8x16xf32, #tpu.memory_space<vmem>>, %arg19: memref<8x16xf32, #tpu.memory_space<vmem>>, %arg20: memref<8x16xf32, #tpu.memory_space<vmem>>, %arg21: memref<8x16xf32, #tpu.memory_space<vmem>>, %arg22: memref<1x1xf32, #tpu.memory_space<vmem>>) attributes {dimension_semantics = [], scalar_prefetch = 0 : i64, scratch_operands = 0 : i64, tpu.core_type = #tpu.core_type<tc>} {
    %c0 = arith.constant 0 : index
    %c0_0 = arith.constant 0 : index
    %0 = vector.load %arg0[%c0, %c0_0] : memref<8x16xf32, #tpu.memory_space<vmem>>, vector<8x16xf32>
    %c0_1 = arith.constant 0 : index
    %c0_2 = arith.constant 0 : index
    %1 = vector.load %arg1[%c0_1, %c0_2] : memref<8x16xf32, #tpu.memory_space<vmem>>, vector<8x16xf32>
    %c0_3 = arith.constant 0 : index
    %c0_4 = arith.constant 0 : index
    %2 = vector.load %arg2[%c0_3, %c0_4] : memref<8x16xf32, #tpu.memory_space<vmem>>, vector<8x16xf32>
    %c0_5 = arith.constant 0 : index
    %c0_6 = arith.constant 0 : index
    %3 = vector.load %arg3[%c0_5, %c0_6] : memref<8x16xf32, #tpu.memory_space<vmem>>, vector<8x16xf32>
    %c0_7 = arith.constant 0 : index
    %c0_8 = arith.constant 0 : index
    %4 = vector.load %arg4[%c0_7, %c0_8] : memref<8x8xf32, #tpu.memory_space<vmem>>, vector<8x8xf32>
    %c0_9 = arith.constant 0 : index
    %c0_10 = arith.constant 0 : index
    %5 = vector.load %arg5[%c0_9, %c0_10] : memref<8x3xf32, #tpu.memory_space<vmem>>, vector<8x3xf32>
    %c0_11 = arith.constant 0 : index
    %c0_12 = arith.constant 0 : index
    %6 = vector.load %arg12[%c0_11, %c0_12] : memref<1x1xf32, #tpu.memory_space<vmem>>, vector<1x1xf32>
    %cst = arith.constant 1.000000e-01 : f32
    %7 = vector.broadcast %cst : f32 to vector<1x1xf32>
    %8 = arith.mulf %7, %6 : vector<1x1xf32>
    %c0_13 = arith.constant 0 : index
    %c0_14 = arith.constant 0 : index
    %9 = vector.load %arg13[%c0_13, %c0_14] : memref<1x1xf32, #tpu.memory_space<vmem>>, vector<1x1xf32>
    %cst_15 = arith.constant 1.000000e-01 : f32
    %10 = vector.broadcast %cst_15 : f32 to vector<1x1xf32>
    %11 = arith.mulf %10, %9 : vector<1x1xf32>
    %c0_16 = arith.constant 0 : index
    %c0_17 = arith.constant 0 : index
    %12 = vector.load %arg14[%c0_16, %c0_17] : memref<1x1xf32, #tpu.memory_space<vmem>>, vector<1x1xf32>
    %cst_18 = arith.constant 1.000000e-01 : f32
    %13 = vector.broadcast %cst_18 : f32 to vector<1x1xf32>
    %14 = arith.mulf %13, %12 : vector<1x1xf32>
    %c0_19 = arith.constant 0 : index
    %c0_20 = arith.constant 0 : index
    %15 = vector.load %arg15[%c0_19, %c0_20] : memref<1x1xf32, #tpu.memory_space<vmem>>, vector<1x1xf32>
    %16 = math.exp %15 : vector<1x1xf32>
    %17 = arith.mulf %3, %2 : vector<8x16xf32>
    %cst_21 = arith.constant dense<0.000000e+00> : vector<16xf32>
    %18 = vector.multi_reduction <add>, %3, %cst_21 [0] : vector<8x16xf32> to vector<16xf32>
    %19 = vector.shape_cast %18 : vector<16xf32> to vector<1x16xf32>
    %20 = arith.mulf %3, %0 : vector<8x16xf32>
    %cst_22 = arith.constant dense<0.000000e+00> : vector<16xf32>
    %21 = vector.multi_reduction <add>, %20, %cst_22 [0] : vector<8x16xf32> to vector<16xf32>
    %22 = vector.shape_cast %21 : vector<16xf32> to vector<1x16xf32>
    %23 = arith.mulf %3, %1 : vector<8x16xf32>
    %cst_23 = arith.constant dense<0.000000e+00> : vector<16xf32>
    %24 = vector.multi_reduction <add>, %23, %cst_23 [0] : vector<8x16xf32> to vector<16xf32>
    %25 = vector.shape_cast %24 : vector<16xf32> to vector<1x16xf32>
    %cst_24 = arith.constant dense<0.000000e+00> : vector<16xf32>
    %26 = vector.multi_reduction <add>, %17, %cst_24 [0] : vector<8x16xf32> to vector<16xf32>
    %27 = vector.shape_cast %26 : vector<16xf32> to vector<1x16xf32>
    %28 = arith.mulf %17, %2 : vector<8x16xf32>
    %cst_25 = arith.constant dense<0.000000e+00> : vector<16xf32>
    %29 = vector.multi_reduction <add>, %28, %cst_25 [0] : vector<8x16xf32> to vector<16xf32>
    %30 = vector.shape_cast %29 : vector<16xf32> to vector<1x16xf32>
    %cst_26 = arith.constant dense<0.000000e+00> : vector<1xf32>
    %31 = vector.multi_reduction <add>, %19, %cst_26 [1] : vector<1x16xf32> to vector<1xf32>
    %32 = vector.shape_cast %31 : vector<1xf32> to vector<1x1xf32>
    %cst_27 = arith.constant dense<0.000000e+00> : vector<1xf32>
    %33 = vector.multi_reduction <add>, %27, %cst_27 [1] : vector<1x16xf32> to vector<1xf32>
    %34 = vector.shape_cast %33 : vector<1xf32> to vector<1x1xf32>
    %cst_28 = arith.constant dense<0.000000e+00> : vector<1xf32>
    %35 = vector.multi_reduction <add>, %30, %cst_28 [1] : vector<1x16xf32> to vector<1xf32>
    %36 = vector.shape_cast %35 : vector<1xf32> to vector<1x1xf32>
    %cst_29 = arith.constant 1.000000e-10 : f32
    %37 = vector.broadcast %cst_29 : f32 to vector<1x1xf32>
    %38 = arith.addf %32, %37 : vector<1x1xf32>
    %cst_30 = arith.constant 1.000000e+00 : f32
    %39 = vector.broadcast %cst_30 : f32 to vector<1x1xf32>
    %40 = arith.divf %39, %38 : vector<1x1xf32>
    %41 = arith.mulf %34, %40 : vector<1x1xf32>
    %42 = arith.mulf %36, %40 : vector<1x1xf32>
    %43 = arith.mulf %41, %41 : vector<1x1xf32>
    %44 = arith.subf %42, %43 : vector<1x1xf32>
    %cst_31 = arith.constant 1.000000e-10 : f32
    %45 = vector.broadcast %cst_31 : f32 to vector<1x1xf32>
    %46 = arith.addf %44, %45 : vector<1x1xf32>
    %47 = math.rsqrt %46 : vector<1x1xf32>
    %48 = arith.mulf %16, %47 : vector<1x1xf32>
    %49 = vector.broadcast %41 : vector<1x1xf32> to vector<8x16xf32>
    %50 = arith.subf %2, %49 : vector<8x16xf32>
    %51 = vector.broadcast %48 : vector<1x1xf32> to vector<8x16xf32>
    %52 = arith.mulf %51, %50 : vector<8x16xf32>
    %cst_32 = arith.constant 1.000000e-10 : f32
    %53 = vector.broadcast %cst_32 : f32 to vector<1x16xf32>
    %54 = arith.addf %19, %53 : vector<1x16xf32>
    %cst_33 = arith.constant 1.000000e+00 : f32
    %55 = vector.broadcast %cst_33 : f32 to vector<1x16xf32>
    %56 = arith.divf %55, %54 : vector<1x16xf32>
    %57 = arith.mulf %22, %56 : vector<1x16xf32>
    %58 = arith.mulf %25, %56 : vector<1x16xf32>
    %59 = vector.broadcast %41 : vector<1x1xf32> to vector<1x16xf32>
    %60 = arith.mulf %59, %19 : vector<1x16xf32>
    %61 = arith.subf %27, %60 : vector<1x16xf32>
    %62 = vector.broadcast %48 : vector<1x1xf32> to vector<1x16xf32>
    %63 = arith.mulf %62, %61 : vector<1x16xf32>
    %64 = arith.mulf %63, %56 : vector<1x16xf32>
    %cst_34 = arith.constant dense<0.000000e+00> : vector<8xf32>
    %65 = vector.multi_reduction <add>, %3, %cst_34 [1] : vector<8x16xf32> to vector<8xf32>
    %66 = vector.shape_cast %65 : vector<8xf32> to vector<8x1xf32>
    %cst_35 = arith.constant 1.000000e-10 : f32
    %67 = vector.broadcast %cst_35 : f32 to vector<8x1xf32>
    %68 = arith.addf %66, %67 : vector<8x1xf32>
    %cst_36 = arith.constant 1.000000e+00 : f32
    %69 = vector.broadcast %cst_36 : f32 to vector<8x1xf32>
    %70 = arith.divf %69, %68 : vector<8x1xf32>
    %71 = vector.broadcast %57 : vector<1x16xf32> to vector<8x16xf32>
    %72 = arith.subf %0, %71 : vector<8x16xf32>
    %73 = arith.mulf %72, %3 : vector<8x16xf32>
    %cst_37 = arith.constant dense<0.000000e+00> : vector<8xf32>
    %74 = vector.multi_reduction <add>, %73, %cst_37 [1] : vector<8x16xf32> to vector<8xf32>
    %75 = vector.shape_cast %74 : vector<8xf32> to vector<8x1xf32>
    %76 = arith.mulf %75, %70 : vector<8x1xf32>
    %77 = vector.broadcast %58 : vector<1x16xf32> to vector<8x16xf32>
    %78 = arith.subf %1, %77 : vector<8x16xf32>
    %79 = arith.mulf %78, %3 : vector<8x16xf32>
    %cst_38 = arith.constant dense<0.000000e+00> : vector<8xf32>
    %80 = vector.multi_reduction <add>, %79, %cst_38 [1] : vector<8x16xf32> to vector<8xf32>
    %81 = vector.shape_cast %80 : vector<8xf32> to vector<8x1xf32>
    %82 = arith.mulf %81, %70 : vector<8x1xf32>
    %83 = vector.broadcast %64 : vector<1x16xf32> to vector<8x16xf32>
    %84 = arith.subf %52, %83 : vector<8x16xf32>
    %85 = arith.mulf %84, %3 : vector<8x16xf32>
    %cst_39 = arith.constant dense<0.000000e+00> : vector<8xf32>
    %86 = vector.multi_reduction <add>, %85, %cst_39 [1] : vector<8x16xf32> to vector<8xf32>
    %87 = vector.shape_cast %86 : vector<8xf32> to vector<8x1xf32>
    %88 = arith.mulf %87, %70 : vector<8x1xf32>
    %c0_40 = arith.constant 0 : index
    %c0_41 = arith.constant 0 : index
    %89 = vector.load %arg6[%c0_40, %c0_41] : memref<1x16xf32, #tpu.memory_space<vmem>>, vector<1x16xf32>
    %cst_42 = arith.constant 1.000000e-01 : f32
    %90 = vector.broadcast %cst_42 : f32 to vector<1x16xf32>
    %91 = arith.mulf %90, %89 : vector<1x16xf32>
    %92 = arith.addf %91, %57 : vector<1x16xf32>
    %c0_43 = arith.constant 0 : index
    %c0_44 = arith.constant 0 : index
    %93 = vector.load %arg7[%c0_43, %c0_44] : memref<1x16xf32, #tpu.memory_space<vmem>>, vector<1x16xf32>
    %cst_45 = arith.constant 1.000000e-01 : f32
    %94 = vector.broadcast %cst_45 : f32 to vector<1x16xf32>
    %95 = arith.mulf %94, %93 : vector<1x16xf32>
    %96 = arith.addf %95, %58 : vector<1x16xf32>
    %c0_46 = arith.constant 0 : index
    %c0_47 = arith.constant 0 : index
    %97 = vector.load %arg8[%c0_46, %c0_47] : memref<1x16xf32, #tpu.memory_space<vmem>>, vector<1x16xf32>
    %cst_48 = arith.constant 1.000000e-01 : f32
    %98 = vector.broadcast %cst_48 : f32 to vector<1x16xf32>
    %99 = arith.mulf %98, %97 : vector<1x16xf32>
    %100 = arith.addf %99, %64 : vector<1x16xf32>
    %c0_49 = arith.constant 0 : index
    %c0_50 = arith.constant 0 : index
    %101 = vector.load %arg9[%c0_49, %c0_50] : memref<8x16xf32, #tpu.memory_space<vmem>>, vector<8x16xf32>
    %cst_51 = arith.constant 1.000000e-01 : f32
    %102 = vector.broadcast %cst_51 : f32 to vector<8x16xf32>
    %103 = arith.mulf %102, %101 : vector<8x16xf32>
    %104 = vector.broadcast %57 : vector<1x16xf32> to vector<8x16xf32>
    %105 = vector.broadcast %76 : vector<8x1xf32> to vector<8x16xf32>
    %106 = arith.addf %104, %105 : vector<8x16xf32>
    %107 = arith.subf %0, %106 : vector<8x16xf32>
    %108 = arith.addf %103, %107 : vector<8x16xf32>
    %c0_52 = arith.constant 0 : index
    %c0_53 = arith.constant 0 : index
    %109 = vector.load %arg10[%c0_52, %c0_53] : memref<8x16xf32, #tpu.memory_space<vmem>>, vector<8x16xf32>
    %cst_54 = arith.constant 1.000000e-01 : f32
    %110 = vector.broadcast %cst_54 : f32 to vector<8x16xf32>
    %111 = arith.mulf %110, %109 : vector<8x16xf32>
    %112 = vector.broadcast %58 : vector<1x16xf32> to vector<8x16xf32>
    %113 = vector.broadcast %82 : vector<8x1xf32> to vector<8x16xf32>
    %114 = arith.addf %112, %113 : vector<8x16xf32>
    %115 = arith.subf %1, %114 : vector<8x16xf32>
    %116 = arith.addf %111, %115 : vector<8x16xf32>
    %c0_55 = arith.constant 0 : index
    %c0_56 = arith.constant 0 : index
    %117 = vector.load %arg11[%c0_55, %c0_56] : memref<8x16xf32, #tpu.memory_space<vmem>>, vector<8x16xf32>
    %cst_57 = arith.constant 1.000000e-01 : f32
    %118 = vector.broadcast %cst_57 : f32 to vector<8x16xf32>
    %119 = arith.mulf %118, %117 : vector<8x16xf32>
    %120 = vector.broadcast %64 : vector<1x16xf32> to vector<8x16xf32>
    %121 = vector.broadcast %88 : vector<8x1xf32> to vector<8x16xf32>
    %122 = arith.addf %120, %121 : vector<8x16xf32>
    %123 = arith.subf %52, %122 : vector<8x16xf32>
    %124 = arith.addf %119, %123 : vector<8x16xf32>
    %cst_58 = arith.constant dense<0.000000e+00> : vector<8x3xf32>
    %125 = tpu.matmul %4, %5, %cst_58 {dimension_numbers = #tpu.dot_dimension_numbers<[1], [0], [0], [1], [0, 0, 1, 1], [], []>} : vector<8x8xf32>, vector<8x3xf32>, vector<8x3xf32> -> vector<8x3xf32>
    %cst_59 = arith.constant 1.000000e-01 : f32
    %126 = vector.broadcast %cst_59 : f32 to vector<8x3xf32>
    %127 = arith.mulf %126, %125 : vector<8x3xf32>
    %cst_60 = arith.constant dense<0.000000e+00> : vector<8x16xf32>
    %128 = tpu.matmul %4, %108, %cst_60 {dimension_numbers = #tpu.dot_dimension_numbers<[1], [0], [0], [1], [0, 0, 1, 1], [], []>} : vector<8x8xf32>, vector<8x16xf32>, vector<8x16xf32> -> vector<8x16xf32>
    %129 = vector.broadcast %92 : vector<1x16xf32> to vector<8x16xf32>
    %130 = arith.addf %129, %128 : vector<8x16xf32>
    %cst_61 = arith.constant dense<0.000000e+00> : vector<8x16xf32>
    %131 = tpu.matmul %4, %116, %cst_61 {dimension_numbers = #tpu.dot_dimension_numbers<[1], [0], [0], [1], [0, 0, 1, 1], [], []>} : vector<8x8xf32>, vector<8x16xf32>, vector<8x16xf32> -> vector<8x16xf32>
    %132 = vector.broadcast %96 : vector<1x16xf32> to vector<8x16xf32>
    %133 = arith.addf %132, %131 : vector<8x16xf32>
    %cst_62 = arith.constant dense<0.000000e+00> : vector<8x16xf32>
    %134 = tpu.matmul %4, %124, %cst_62 {dimension_numbers = #tpu.dot_dimension_numbers<[1], [0], [0], [1], [0, 0, 1, 1], [], []>} : vector<8x8xf32>, vector<8x16xf32>, vector<8x16xf32> -> vector<8x16xf32>
    %135 = vector.broadcast %100 : vector<1x16xf32> to vector<8x16xf32>
    %136 = arith.addf %135, %134 : vector<8x16xf32>
    %137 = math.cos %127 : vector<8x3xf32>
    %138 = math.sin %127 : vector<8x3xf32>
    %139 = vector.extract_strided_slice %137 {offsets = [0, 0], sizes = [8, 1], strides = [1, 1]} : vector<8x3xf32> to vector<8x1xf32>
    %140 = vector.extract_strided_slice %137 {offsets = [0, 1], sizes = [8, 1], strides = [1, 1]} : vector<8x3xf32> to vector<8x1xf32>
    %141 = vector.extract_strided_slice %137 {offsets = [0, 2], sizes = [8, 1], strides = [1, 1]} : vector<8x3xf32> to vector<8x1xf32>
    %142 = vector.extract_strided_slice %138 {offsets = [0, 0], sizes = [8, 1], strides = [1, 1]} : vector<8x3xf32> to vector<8x1xf32>
    %143 = vector.extract_strided_slice %138 {offsets = [0, 1], sizes = [8, 1], strides = [1, 1]} : vector<8x3xf32> to vector<8x1xf32>
    %144 = vector.extract_strided_slice %138 {offsets = [0, 2], sizes = [8, 1], strides = [1, 1]} : vector<8x3xf32> to vector<8x1xf32>
    %145 = arith.mulf %141, %140 : vector<8x1xf32>
    %146 = arith.mulf %141, %143 : vector<8x1xf32>
    %147 = arith.mulf %146, %142 : vector<8x1xf32>
    %148 = arith.mulf %144, %139 : vector<8x1xf32>
    %149 = arith.subf %147, %148 : vector<8x1xf32>
    %150 = arith.mulf %141, %143 : vector<8x1xf32>
    %151 = arith.mulf %150, %139 : vector<8x1xf32>
    %152 = arith.mulf %144, %142 : vector<8x1xf32>
    %153 = arith.addf %151, %152 : vector<8x1xf32>
    %154 = arith.mulf %144, %140 : vector<8x1xf32>
    %155 = arith.mulf %144, %143 : vector<8x1xf32>
    %156 = arith.mulf %155, %142 : vector<8x1xf32>
    %157 = arith.mulf %141, %139 : vector<8x1xf32>
    %158 = arith.addf %156, %157 : vector<8x1xf32>
    %159 = arith.mulf %144, %143 : vector<8x1xf32>
    %160 = arith.mulf %159, %139 : vector<8x1xf32>
    %161 = arith.mulf %141, %142 : vector<8x1xf32>
    %162 = arith.subf %160, %161 : vector<8x1xf32>
    %cst_63 = arith.constant 0.000000e+00 : f32
    %163 = vector.broadcast %cst_63 : f32 to vector<8x1xf32>
    %164 = arith.subf %163, %143 : vector<8x1xf32>
    %165 = arith.mulf %140, %142 : vector<8x1xf32>
    %166 = arith.mulf %140, %139 : vector<8x1xf32>
    %167 = arith.mulf %145, %145 : vector<8x1xf32>
    %168 = arith.mulf %149, %154 : vector<8x1xf32>
    %169 = arith.addf %167, %168 : vector<8x1xf32>
    %170 = arith.mulf %153, %164 : vector<8x1xf32>
    %171 = arith.addf %169, %170 : vector<8x1xf32>
    %172 = arith.mulf %145, %149 : vector<8x1xf32>
    %173 = arith.mulf %149, %158 : vector<8x1xf32>
    %174 = arith.addf %172, %173 : vector<8x1xf32>
    %175 = arith.mulf %153, %165 : vector<8x1xf32>
    %176 = arith.addf %174, %175 : vector<8x1xf32>
    %177 = arith.mulf %145, %153 : vector<8x1xf32>
    %178 = arith.mulf %149, %162 : vector<8x1xf32>
    %179 = arith.addf %177, %178 : vector<8x1xf32>
    %180 = arith.mulf %153, %166 : vector<8x1xf32>
    %181 = arith.addf %179, %180 : vector<8x1xf32>
    %182 = arith.mulf %154, %145 : vector<8x1xf32>
    %183 = arith.mulf %158, %154 : vector<8x1xf32>
    %184 = arith.addf %182, %183 : vector<8x1xf32>
    %185 = arith.mulf %162, %164 : vector<8x1xf32>
    %186 = arith.addf %184, %185 : vector<8x1xf32>
    %187 = arith.mulf %154, %149 : vector<8x1xf32>
    %188 = arith.mulf %158, %158 : vector<8x1xf32>
    %189 = arith.addf %187, %188 : vector<8x1xf32>
    %190 = arith.mulf %162, %165 : vector<8x1xf32>
    %191 = arith.addf %189, %190 : vector<8x1xf32>
    %192 = arith.mulf %154, %153 : vector<8x1xf32>
    %193 = arith.mulf %158, %162 : vector<8x1xf32>
    %194 = arith.addf %192, %193 : vector<8x1xf32>
    %195 = arith.mulf %162, %166 : vector<8x1xf32>
    %196 = arith.addf %194, %195 : vector<8x1xf32>
    %197 = arith.mulf %164, %145 : vector<8x1xf32>
    %198 = arith.mulf %165, %154 : vector<8x1xf32>
    %199 = arith.addf %197, %198 : vector<8x1xf32>
    %200 = arith.mulf %166, %164 : vector<8x1xf32>
    %201 = arith.addf %199, %200 : vector<8x1xf32>
    %202 = arith.mulf %164, %149 : vector<8x1xf32>
    %203 = arith.mulf %165, %158 : vector<8x1xf32>
    %204 = arith.addf %202, %203 : vector<8x1xf32>
    %205 = arith.mulf %166, %165 : vector<8x1xf32>
    %206 = arith.addf %204, %205 : vector<8x1xf32>
    %207 = arith.mulf %164, %153 : vector<8x1xf32>
    %208 = arith.mulf %165, %162 : vector<8x1xf32>
    %209 = arith.addf %207, %208 : vector<8x1xf32>
    %210 = arith.mulf %166, %166 : vector<8x1xf32>
    %211 = arith.addf %209, %210 : vector<8x1xf32>
    %212 = vector.shape_cast %171 : vector<8x1xf32> to vector<8x1xf32>
    %213 = vector.broadcast %212 : vector<8x1xf32> to vector<8x16xf32>
    %214 = vector.shape_cast %176 : vector<8x1xf32> to vector<8x1xf32>
    %215 = vector.broadcast %214 : vector<8x1xf32> to vector<8x16xf32>
    %216 = vector.shape_cast %181 : vector<8x1xf32> to vector<8x1xf32>
    %217 = vector.broadcast %216 : vector<8x1xf32> to vector<8x16xf32>
    %218 = vector.shape_cast %186 : vector<8x1xf32> to vector<8x1xf32>
    %219 = vector.broadcast %218 : vector<8x1xf32> to vector<8x16xf32>
    %220 = vector.shape_cast %191 : vector<8x1xf32> to vector<8x1xf32>
    %221 = vector.broadcast %220 : vector<8x1xf32> to vector<8x16xf32>
    %222 = vector.shape_cast %196 : vector<8x1xf32> to vector<8x1xf32>
    %223 = vector.broadcast %222 : vector<8x1xf32> to vector<8x16xf32>
    %224 = vector.shape_cast %201 : vector<8x1xf32> to vector<8x1xf32>
    %225 = vector.broadcast %224 : vector<8x1xf32> to vector<8x16xf32>
    %226 = vector.shape_cast %206 : vector<8x1xf32> to vector<8x1xf32>
    %227 = vector.broadcast %226 : vector<8x1xf32> to vector<8x16xf32>
    %228 = vector.shape_cast %211 : vector<8x1xf32> to vector<8x1xf32>
    %229 = vector.broadcast %228 : vector<8x1xf32> to vector<8x16xf32>
    %230 = vector.broadcast %8 : vector<1x1xf32> to vector<8x16xf32>
    %231 = arith.subf %130, %230 : vector<8x16xf32>
    %232 = vector.broadcast %11 : vector<1x1xf32> to vector<8x16xf32>
    %233 = arith.subf %133, %232 : vector<8x16xf32>
    %234 = vector.broadcast %14 : vector<1x1xf32> to vector<8x16xf32>
    %235 = arith.subf %136, %234 : vector<8x16xf32>
    %236 = arith.mulf %213, %231 : vector<8x16xf32>
    %237 = arith.mulf %215, %233 : vector<8x16xf32>
    %238 = arith.addf %236, %237 : vector<8x16xf32>
    %239 = arith.mulf %217, %235 : vector<8x16xf32>
    %240 = arith.addf %238, %239 : vector<8x16xf32>
    %241 = vector.broadcast %8 : vector<1x1xf32> to vector<8x16xf32>
    %242 = arith.addf %240, %241 : vector<8x16xf32>
    %243 = arith.mulf %219, %231 : vector<8x16xf32>
    %244 = arith.mulf %221, %233 : vector<8x16xf32>
    %245 = arith.addf %243, %244 : vector<8x16xf32>
    %246 = arith.mulf %223, %235 : vector<8x16xf32>
    %247 = arith.addf %245, %246 : vector<8x16xf32>
    %248 = vector.broadcast %11 : vector<1x1xf32> to vector<8x16xf32>
    %249 = arith.addf %247, %248 : vector<8x16xf32>
    %250 = arith.mulf %225, %231 : vector<8x16xf32>
    %251 = arith.mulf %227, %233 : vector<8x16xf32>
    %252 = arith.addf %250, %251 : vector<8x16xf32>
    %253 = arith.mulf %229, %235 : vector<8x16xf32>
    %254 = arith.addf %252, %253 : vector<8x16xf32>
    %255 = vector.broadcast %14 : vector<1x1xf32> to vector<8x16xf32>
    %256 = arith.addf %254, %255 : vector<8x16xf32>
    %257 = vector.broadcast %8 : vector<1x1xf32> to vector<1x16xf32>
    %258 = arith.subf %92, %257 : vector<1x16xf32>
    %259 = vector.shape_cast %258 : vector<1x16xf32> to vector<1x16xf32>
    %260 = vector.broadcast %259 : vector<1x16xf32> to vector<8x16xf32>
    %261 = vector.broadcast %11 : vector<1x1xf32> to vector<1x16xf32>
    %262 = arith.subf %96, %261 : vector<1x16xf32>
    %263 = vector.shape_cast %262 : vector<1x16xf32> to vector<1x16xf32>
    %264 = vector.broadcast %263 : vector<1x16xf32> to vector<8x16xf32>
    %265 = vector.broadcast %14 : vector<1x1xf32> to vector<1x16xf32>
    %266 = arith.subf %100, %265 : vector<1x16xf32>
    %267 = vector.shape_cast %266 : vector<1x16xf32> to vector<1x16xf32>
    %268 = vector.broadcast %267 : vector<1x16xf32> to vector<8x16xf32>
    %269 = arith.mulf %213, %260 : vector<8x16xf32>
    %270 = arith.mulf %215, %264 : vector<8x16xf32>
    %271 = arith.addf %269, %270 : vector<8x16xf32>
    %272 = arith.mulf %217, %268 : vector<8x16xf32>
    %273 = arith.addf %271, %272 : vector<8x16xf32>
    %274 = vector.broadcast %8 : vector<1x1xf32> to vector<8x16xf32>
    %275 = arith.addf %273, %274 : vector<8x16xf32>
    %276 = arith.mulf %219, %260 : vector<8x16xf32>
    %277 = arith.mulf %221, %264 : vector<8x16xf32>
    %278 = arith.addf %276, %277 : vector<8x16xf32>
    %279 = arith.mulf %223, %268 : vector<8x16xf32>
    %280 = arith.addf %278, %279 : vector<8x16xf32>
    %281 = vector.broadcast %11 : vector<1x1xf32> to vector<8x16xf32>
    %282 = arith.addf %280, %281 : vector<8x16xf32>
    %283 = arith.mulf %225, %260 : vector<8x16xf32>
    %284 = arith.mulf %227, %264 : vector<8x16xf32>
    %285 = arith.addf %283, %284 : vector<8x16xf32>
    %286 = arith.mulf %229, %268 : vector<8x16xf32>
    %287 = arith.addf %285, %286 : vector<8x16xf32>
    %288 = vector.broadcast %14 : vector<1x1xf32> to vector<8x16xf32>
    %289 = arith.addf %287, %288 : vector<8x16xf32>
    %c0_64 = arith.constant 0 : index
    %c0_65 = arith.constant 0 : index
    %290 = vector.load %arg16[%c0_64, %c0_65] : memref<8x16xf32, #tpu.memory_space<vmem>>, vector<8x16xf32>
    tpu.vector_store %arg16[%c0_64, %c0_65], %242 {strides = array<i32>} : memref<8x16xf32, #tpu.memory_space<vmem>>, vector<8x16xf32>,
    %c0_66 = arith.constant 0 : index
    %c0_67 = arith.constant 0 : index
    %291 = vector.load %arg17[%c0_66, %c0_67] : memref<8x16xf32, #tpu.memory_space<vmem>>, vector<8x16xf32>
    tpu.vector_store %arg17[%c0_66, %c0_67], %249 {strides = array<i32>} : memref<8x16xf32, #tpu.memory_space<vmem>>, vector<8x16xf32>,
    %c0_68 = arith.constant 0 : index
    %c0_69 = arith.constant 0 : index
    %292 = vector.load %arg18[%c0_68, %c0_69] : memref<8x16xf32, #tpu.memory_space<vmem>>, vector<8x16xf32>
    tpu.vector_store %arg18[%c0_68, %c0_69], %256 {strides = array<i32>} : memref<8x16xf32, #tpu.memory_space<vmem>>, vector<8x16xf32>,
    %c0_70 = arith.constant 0 : index
    %c0_71 = arith.constant 0 : index
    %293 = vector.load %arg19[%c0_70, %c0_71] : memref<8x16xf32, #tpu.memory_space<vmem>>, vector<8x16xf32>
    tpu.vector_store %arg19[%c0_70, %c0_71], %275 {strides = array<i32>} : memref<8x16xf32, #tpu.memory_space<vmem>>, vector<8x16xf32>,
    %c0_72 = arith.constant 0 : index
    %c0_73 = arith.constant 0 : index
    %294 = vector.load %arg20[%c0_72, %c0_73] : memref<8x16xf32, #tpu.memory_space<vmem>>, vector<8x16xf32>
    tpu.vector_store %arg20[%c0_72, %c0_73], %282 {strides = array<i32>} : memref<8x16xf32, #tpu.memory_space<vmem>>, vector<8x16xf32>,
    %c0_74 = arith.constant 0 : index
    %c0_75 = arith.constant 0 : index
    %295 = vector.load %arg21[%c0_74, %c0_75] : memref<8x16xf32, #tpu.memory_space<vmem>>, vector<8x16xf32>
    tpu.vector_store %arg21[%c0_74, %c0_75], %289 {strides = array<i32>} : memref<8x16xf32, #tpu.memory_space<vmem>>, vector<8x16xf32>,
    %296 = vector.extract_strided_slice %242 {offsets = [1, 0], sizes = [7, 16], strides = [1, 1]} : vector<8x16xf32> to vector<7x16xf32>
    %297 = vector.extract_strided_slice %242 {offsets = [0, 0], sizes = [7, 16], strides = [1, 1]} : vector<8x16xf32> to vector<7x16xf32>
    %298 = arith.subf %296, %297 : vector<7x16xf32>
    %299 = vector.extract_strided_slice %249 {offsets = [1, 0], sizes = [7, 16], strides = [1, 1]} : vector<8x16xf32> to vector<7x16xf32>
    %300 = vector.extract_strided_slice %249 {offsets = [0, 0], sizes = [7, 16], strides = [1, 1]} : vector<8x16xf32> to vector<7x16xf32>
    %301 = arith.subf %299, %300 : vector<7x16xf32>
    %302 = vector.extract_strided_slice %256 {offsets = [1, 0], sizes = [7, 16], strides = [1, 1]} : vector<8x16xf32> to vector<7x16xf32>
    %303 = vector.extract_strided_slice %256 {offsets = [0, 0], sizes = [7, 16], strides = [1, 1]} : vector<8x16xf32> to vector<7x16xf32>
    %304 = arith.subf %302, %303 : vector<7x16xf32>
    %305 = arith.mulf %298, %298 : vector<7x16xf32>
    %306 = arith.mulf %301, %301 : vector<7x16xf32>
    %307 = arith.addf %305, %306 : vector<7x16xf32>
    %308 = arith.mulf %304, %304 : vector<7x16xf32>
    %309 = arith.addf %307, %308 : vector<7x16xf32>
    %310 = math.sqrt %309 : vector<7x16xf32>
    %311 = vector.shape_cast %310 : vector<7x16xf32> to vector<1x7x16xf32>
    %cst_76 = arith.constant dense<0.000000e+00> : vector<1xf32>
    %312 = vector.multi_reduction <add>, %311, %cst_76 [1, 2] : vector<1x7x16xf32> to vector<1xf32>
    %313 = vector.shape_cast %312 : vector<1xf32> to vector<1x1x1xf32>
    %314 = vector.extract %313[0, 0, 0] : f32 from vector<1x1x1xf32>
    %315 = vector.broadcast %314 : f32 to vector<1x1xf32>
    %cst_77 = arith.constant 7.812500e-03 : f32
    %316 = vector.broadcast %cst_77 : f32 to vector<1x1xf32>
    %317 = arith.mulf %315, %316 : vector<1x1xf32>
    %c0_78 = arith.constant 0 : index
    %c0_79 = arith.constant 0 : index
    %318 = vector.load %arg22[%c0_78, %c0_79] : memref<1x1xf32, #tpu.memory_space<vmem>>, vector<1x1xf32>
    tpu.vector_store %arg22[%c0_78, %c0_79], %317 {strides = array<i32>} : memref<1x1xf32, #tpu.memory_space<vmem>>, vector<1x1xf32>,
    return
  }
}

</mosaic_0001>

<llo_original>
// kernel: model_forward_pallas.1
$region0: #{model_forward_pallas.1}
  #allocation0 [shape = 'u32[]', space=smem, size = 0x4, offset = 0x4, fixed_abs, tag = 'smem constant byte address 0x4 - core index']
  #allocation1 [shape = 'u32[144,128]{1,0:T(1,128)}', space=vmem, size = 0x12000, scoped, tag = 'internal scratch']
  #allocation2 [shape = 'f32[1,1]{1,0:T(1,128)S(1)}', space=vmem, size = 0x200, scoped, tag = 'scoped memory for model_forward_pallas.1']
  #allocation3 [shape = 'f32[1,1]{1,0:T(1,128)S(1)}', space=vmem, size = 0x200, scoped, tag = 'scoped memory for model_forward_pallas.1']
  #allocation4 [shape = 'f32[1,1]{1,0:T(1,128)S(1)}', space=vmem, size = 0x200, scoped, tag = 'scoped memory for model_forward_pallas.1']
  #allocation5 [shape = 'f32[1,1]{1,0:T(1,128)S(1)}', space=vmem, size = 0x200, scoped, tag = 'scoped memory for model_forward_pallas.1']
  %s0 = inlined_call_operand.vmem [shape: f32[8,16], index: 0, kind: input, shape index: {}]
  %s1 = inlined_call_operand.vmem [shape: f32[8,16], index: 1, kind: input, shape index: {}]
  %s2 = inlined_call_operand.vmem [shape: f32[8,16], index: 2, kind: input, shape index: {}]
  %s3 = inlined_call_operand.vmem [shape: f32[8,16], index: 3, kind: input, shape index: {}]
  %s4 = inlined_call_operand.vmem [shape: f32[8,8], index: 4, kind: input, shape index: {}]
  %s5 = inlined_call_operand.vmem [shape: f32[8,3], index: 5, kind: input, shape index: {}]
  %s6 = inlined_call_operand.vmem [shape: f32[1,16], index: 6, kind: input, shape index: {}]
  %s7 = inlined_call_operand.vmem [shape: f32[1,16], index: 7, kind: input, shape index: {}]
  %s8 = inlined_call_operand.vmem [shape: f32[1,16], index: 8, kind: input, shape index: {}]
  %s9 = inlined_call_operand.vmem [shape: f32[8,16], index: 9, kind: input, shape index: {}]
  %s10 = inlined_call_operand.vmem [shape: f32[8,16], index: 10, kind: input, shape index: {}]
  %s11 = inlined_call_operand.vmem [shape: f32[8,16], index: 11, kind: input, shape index: {}]
  %s12 = inlined_call_operand.<no memory space> [shape: f32[1,1], index: 12, kind: input, shape index: {}]
  %s13 = inlined_call_operand.<no memory space> [shape: f32[1,1], index: 13, kind: input, shape index: {}]
  %s14 = inlined_call_operand.<no memory space> [shape: f32[1,1], index: 14, kind: input, shape index: {}]
  %s15 = inlined_call_operand.<no memory space> [shape: f32[1,1], index: 15, kind: input, shape index: {}]
  %s16 = inlined_call_operand.hbm [shape: f32[8,16], index: 16, kind: output, shape index: {0}]
  %s17 = inlined_call_operand.hbm [shape: f32[8,16], index: 17, kind: output, shape index: {1}]
  %s18 = inlined_call_operand.hbm [shape: f32[8,16], index: 18, kind: output, shape index: {2}]
  %s19 = inlined_call_operand.hbm [shape: f32[8,16], index: 19, kind: output, shape index: {3}]
  %s20 = inlined_call_operand.hbm [shape: f32[8,16], index: 20, kind: output, shape index: {4}]
  %s21 = inlined_call_operand.hbm [shape: f32[8,16], index: 21, kind: output, shape index: {5}]
  %s22 = inlined_call_operand.hbm [shape: f32[1,1], index: 22, kind: output, shape index: {6}]
  %23 = xla_tuple %s16, %s17, %s18, %s19, %s20, %s21, %s22
  %s24 = sld [smem:[#allocation0]]
  $region122: #{model_forward_pallas.1} parent=0
    _
  %s26 = ssub.s32 1, %s24
  %s27 = scalar_select 0, %s26, %s24
  %v28 = vstv %s12
  %29 = vst [vmem:[#allocation2] sm:$0x1] %v28
  %v30 = vstv %s13
  %31 = vst [vmem:[#allocation3] sm:$0x1] %v30
  %v32 = vstv %s14
  %33 = vst [vmem:[#allocation4] sm:$0x1] %v32
  %v34 = vstv %s15
  %35 = vst [vmem:[#allocation5] sm:$0x1] %v34
  $region1: #{model_forward_pallas.1} parent=0
    #allocation6 [shape = 'u8[4096]{0}', space=vmem, size = 0x1000, scoped, tag = 'output window, operand 0, single buffered']
    #allocation7 [shape = 's32[1]{0}', space=sflag, size = 0x4, scoped, tag = 'scoped memory for model_forward_pallas.1']
    #allocation8 [shape = 'u8[4096]{0}', space=vmem, size = 0x1000, scoped, tag = 'output window, operand 1, single buffered']
    #allocation9 [shape = 's32[1]{0}', space=sflag, size = 0x4, scoped, tag = 'scoped memory for model_forward_pallas.1']
    #allocation10 [shape = 'u8[4096]{0}', space=vmem, size = 0x1000, scoped, tag = 'output window, operand 2, single buffered']
    #allocation11 [shape = 'u8[4096]{0}', space=vmem, size = 0x1000, scoped, tag = 'output window, operand 3, single buffered']
    #allocation12 [shape = 's32[1]{0}', space=sflag, size = 0x4, scoped, tag = 'scoped memory for model_forward_pallas.1']
    #allocation13 [shape = 'u8[4096]{0}', space=vmem, size = 0x1000, scoped, tag = 'output window, operand 4, single buffered']
    #allocation14 [shape = 'u8[4096]{0}', space=vmem, size = 0x1000, scoped, tag = 'output window, operand 5, single buffered']
    #allocation15 [shape = 's32[1]{0}', space=sflag, size = 0x4, scoped, tag = 'scoped memory for model_forward_pallas.1']
    #allocation16 [shape = 'u8[512]{0}', space=vmem, size = 0x400, scoped, tag = 'output window, operand 6, single buffered']
    %36 = vsyncpa [#allocation7], 0
    %37 = vsyncpa [#allocation9], 0
    %38 = vsyncpa [#allocation12], 0
    %39 = vsyncpa [#allocation15], 0
    // Predicated region
    $region2: #{model_forward_pallas.1} parent=1 // pred_check
      _
    $region3: #{model_forward_pallas.1} parent=1 // pred_check_branch
      %41 = sbr.rel (0) target = $region5
    $region4: #{model_forward_pallas.1} parent=1 // pred_region
      _
    $region5: #{model_forward_pallas.1} parent=1 // pred_fallthru
      _
    // Predicated region
    $region6: #{model_forward_pallas.1} parent=1 // pred_check
      _
    $region7: #{model_forward_pallas.1} parent=1 // pred_check_branch
      %43 = sbr.rel (0) target = $region9
    $region8: #{model_forward_pallas.1} parent=1 // pred_region
      _
    $region9: #{model_forward_pallas.1} parent=1 // pred_fallthru
      _
    // Predicated region
    $region10: #{model_forward_pallas.1} parent=1 // pred_check
      _
    $region11: #{model_forward_pallas.1} parent=1 // pred_check_branch
      %45 = sbr.rel (0) target = $region13
    $region12: #{model_forward_pallas.1} parent=1 // pred_region
      _
    $region13: #{model_forward_pallas.1} parent=1 // pred_fallthru
      _
    // Predicated region
    $region14: #{model_forward_pallas.1} parent=1 // pred_check
      _
    $region15: #{model_forward_pallas.1} parent=1 // pred_check_branch
      %47 = sbr.rel (0) target = $region17
    $region16: #{model_forward_pallas.1} parent=1 // pred_region
      _
    $region17: #{model_forward_pallas.1} parent=1 // pred_fallthru
      _
    // Predicated region
    $region18: #{model_forward_pallas.1} parent=1 // pred_check
      _
    $region19: #{model_forward_pallas.1} parent=1 // pred_check_branch
      %49 = sbr.rel (0) target = $region21
    $region20: #{model_forward_pallas.1} parent=1 // pred_region
      _
    $region21: #{model_forward_pallas.1} parent=1 // pred_fallthru
      _
    // Predicated region
    $region22: #{model_forward_pallas.1} parent=1 // pred_check
      _
    $region23: #{model_forward_pallas.1} parent=1 // pred_check_branch
      %51 = sbr.rel (0) target = $region25
    $region24: #{model_forward_pallas.1} parent=1 // pred_region
      _
    $region25: #{model_forward_pallas.1} parent=1 // pred_fallthru
      _
    // Predicated region
    $region26: #{model_forward_pallas.1} parent=1 // pred_check
      _
    $region27: #{model_forward_pallas.1} parent=1 // pred_check_branch
      %53 = sbr.rel (0) target = $region29
    $region28: #{model_forward_pallas.1} parent=1 // pred_region
      _
    $region29: #{model_forward_pallas.1} parent=1 // pred_fallthru
      _
    // Predicated region
    $region30: #{model_forward_pallas.1} parent=1 // pred_check
      _
    $region31: #{model_forward_pallas.1} parent=1 // pred_check_branch
      %55 = sbr.rel (0) target = $region33
    $region32: #{model_forward_pallas.1} parent=1 // pred_region
      _
    $region33: #{model_forward_pallas.1} parent=1 // pred_fallthru
      _
    // Predicated region
    $region34: #{model_forward_pallas.1} parent=1 // pred_check
      _
    $region35: #{model_forward_pallas.1} parent=1 // pred_check_branch
      %57 = sbr.rel (0) target = $region37
    $region36: #{model_forward_pallas.1} parent=1 // pred_region
      _
    $region37: #{model_forward_pallas.1} parent=1 // pred_fallthru
      _
    // Predicated region
    $region38: #{model_forward_pallas.1} parent=1 // pred_check
      _
    $region39: #{model_forward_pallas.1} parent=1 // pred_check_branch
      %59 = sbr.rel (0) target = $region41
    $region40: #{model_forward_pallas.1} parent=1 // pred_region
      _
    $region41: #{model_forward_pallas.1} parent=1 // pred_fallthru
      _
    // Predicated region
    $region42: #{model_forward_pallas.1} parent=1 // pred_check
      _
    $region43: #{model_forward_pallas.1} parent=1 // pred_check_branch
      %61 = sbr.rel (0) target = $region45
    $region44: #{model_forward_pallas.1} parent=1 // pred_region
      _
    $region45: #{model_forward_pallas.1} parent=1 // pred_fallthru
      _
    // Predicated region
    $region46: #{model_forward_pallas.1} parent=1 // pred_check
      _
    $region47: #{model_forward_pallas.1} parent=1 // pred_check_branch
      %63 = sbr.rel (0) target = $region49
    $region48: #{model_forward_pallas.1} parent=1 // pred_region
      _
    $region49: #{model_forward_pallas.1} parent=1 // pred_fallthru
      _
    // Predicated region
    $region50: #{model_forward_pallas.1} parent=1 // pred_check
      _
    $region51: #{model_forward_pallas.1} parent=1 // pred_check_branch
      %65 = sbr.rel (0) target = $region53
    $region52: #{model_forward_pallas.1} parent=1 // pred_region
      _
    $region53: #{model_forward_pallas.1} parent=1 // pred_fallthru
      _
    // Predicated region
    $region54: #{model_forward_pallas.1} parent=1 // pred_check
      _
    $region55: #{model_forward_pallas.1} parent=1 // pred_check_branch
      %67 = sbr.rel (0) target = $region57
    $region56: #{model_forward_pallas.1} parent=1 // pred_region
      _
    $region57: #{model_forward_pallas.1} parent=1 // pred_fallthru
      _
    // Predicated region
    $region58: #{model_forward_pallas.1} parent=1 // pred_check
      _
    $region59: #{model_forward_pallas.1} parent=1 // pred_check_branch
      %69 = sbr.rel (0) target = $region61
    $region60: #{model_forward_pallas.1} parent=1 // pred_region
      _
    $region61: #{model_forward_pallas.1} parent=1 // pred_fallthru
      _
    // Predicated region
    $region62: #{model_forward_pallas.1} parent=1 // pred_check
      _
    $region63: #{model_forward_pallas.1} parent=1 // pred_check_branch
      %71 = sbr.rel (0) target = $region65
    $region64: #{model_forward_pallas.1} parent=1 // pred_region
      _
    $region65: #{model_forward_pallas.1} parent=1 // pred_fallthru
      _
    %v72 = vld [vmem:[%s0] sm:$0xff]
    %v73 = vld [vmem:[%s1] sm:$0xff]
    %v74 = vld [vmem:[%s2] sm:$0xff]
    %v75 = vld [vmem:[%s3] sm:$0xff]
    %v76 = vld [vmem:[%s4] sm:$0xff]
    %v77 = vld [vmem:[%s5] sm:$0xff]
    %v78 = vld [vmem:[#allocation2] sm:$0x1]
    %v79 = vmul.f32 %v78, 0.1
    %v80 = vld [vmem:[#allocation3] sm:$0x1]
    %v81 = vmul.f32 %v80, 0.1
    %v82 = vld [vmem:[#allocation4] sm:$0x1]
    %v83 = vmul.f32 %v82, 0.1
    %v84 = vld [vmem:[#allocation5] sm:$0x1]
    %v85 = vmul.f32 %v84, 1.442695
    %v86 = vpow.pop %v85
    %v87 = vmul.f32 %v75, %v74
    %vm88 = vcmask 130048
    %v89 = vsel %vm88, %v75, 0.0
    %v90 = vrot.slane %v89, 4
    %v91 = vadd.f32 %v89, %v90
    %v92 = vrot.slane %v91, 2
    %v93 = vadd.f32 %v91, %v92
    %v94 = vrot.slane %v93, 1
    %v95 = vadd.f32 %v93, %v94
    %v96 = vmul.f32 %v75, %v72
    %v97 = vsel %vm88, %v96, 0.0
    %v98 = vrot.slane %v97, 4
    %v99 = vadd.f32 %v97, %v98
    %v100 = vrot.slane %v99, 2
    %v101 = vadd.f32 %v99, %v100
    %v102 = vrot.slane %v101, 1
    %v103 = vadd.f32 %v101, %v102
    %v104 = vmul.f32 %v75, %v73
    %v105 = vsel %vm88, %v104, 0.0
    %v106 = vrot.slane %v105, 4
    %v107 = vadd.f32 %v105, %v106
    %v108 = vrot.slane %v107, 2
    %v109 = vadd.f32 %v107, %v108
    %v110 = vrot.slane %v109, 1
    %v111 = vadd.f32 %v109, %v110
    %v112 = vsel %vm88, %v87, 0.0
    %v113 = vrot.slane %v112, 4
    %v114 = vadd.f32 %v112, %v113
    %v115 = vrot.slane %v114, 2
    %v116 = vadd.f32 %v114, %v115
    %v117 = vrot.slane %v116, 1
    %v118 = vadd.f32 %v116, %v117
    %v119 = vmul.f32 %v87, %v74
    %v120 = vsel %vm88, %v119, 0.0
    %v121 = vrot.slane %v120, 4
    %v122 = vadd.f32 %v120, %v121
    %v123 = vrot.slane %v122, 2
    %v124 = vadd.f32 %v122, %v123
    %v125 = vrot.slane %v124, 1
    %v126 = vadd.f32 %v124, %v125
    %v127 = vsel %vm88, %v95, 0.0
    %128 = vadd.xlane.f32.xlu0 %v127
    %v129 = vpop.xlane.xlu0 %128
    %v130 = vsel %vm88, %v118, 0.0
    %131 = vadd.xlane.f32.xlu0 %v130
    %v132 = vpop.xlane.xlu0 %131
    %v133 = vsel %vm88, %v126, 0.0
    %134 = vadd.xlane.f32.xlu0 %v133
    %v135 = vpop.xlane.xlu0 %134
    %v136 = vadd.f32 %v129, 1e-10
    %v137 = vrcp.pop %v136
    %v138 = vmul.f32 1.0, %v137
    %v139 = vmul.f32 %v132, %v138
    %v140 = vmul.f32 %v135, %v138
    %v141 = vmul.f32 %v139, %v139
    %v142 = vsub.f32 %v140, %v141
    %v143 = vadd.f32 %v142, 1e-10
    %v144 = vrsqrt.pop %v143
    %v145 = vmul.f32 %v86, %v144
    %v146 = vsub.f32 %v74, %v139
    %v148 = vlaneseq
    %v149 = vshrl.u32 %v148, 7
    %v150 = vsub.s32 0, %v149
    %v151 = vrot.slane %v145, %v150
    %152 = vset.pattern.permute.xlu0 0
    %153 = vperm.xlu0 %152, %v151
    %v154 = vpop.permute.xlu0 %153
    %v156 = vmul.f32 %v154, %v146
    %v157 = vadd.f32 %v95, 1e-10
    %v158 = vrcp.pop %v157
    %v159 = vmul.f32 1.0, %v158
    %v160 = vmul.f32 %v103, %v159
    %v161 = vmul.f32 %v111, %v159
    %v162 = vmul.f32 %v139, %v95
    %v163 = vsub.f32 %v118, %v162
    %164 = vset.pattern.permute.xlu0 0
    %165 = vperm.xlu0 %164, %v145
    %v166 = vpop.permute.xlu0 %165
    %v168 = vlaneseq
    %v169 = vshrl.u32 %v168, 7
    %v170 = vsub.s32 0, %v169
    %v171 = vrot.slane %v166, %v170
    %v172 = vmul.f32 %v171, %v163
    %v173 = vmul.f32 %v172, %v159
    %174 = vadd.xlane.f32.xlu0 %v89
    %v175 = vpop.xlane.xlu0 %174
    %v176 = vadd.f32 %v175, 1e-10
    %v177 = vrcp.pop %v176
    %v178 = vmul.f32 1.0, %v177
    %v179 = vsub.f32 %v72, %v160
    %v180 = vmul.f32 %v179, %v75
    %v181 = vsel %vm88, %v180, 0.0
    %182 = vadd.xlane.f32.xlu0 %v181
    %v183 = vpop.xlane.xlu0 %182
    %v184 = vmul.f32 %v183, %v178
    %v185 = vsub.f32 %v73, %v161
    %v186 = vmul.f32 %v185, %v75
    %v187 = vsel %vm88, %v186, 0.0
    %188 = vadd.xlane.f32.xlu0 %v187
    %v189 = vpop.xlane.xlu0 %188
    %v190 = vmul.f32 %v189, %v178
    %v191 = vsub.f32 %v156, %v173
    %v192 = vmul.f32 %v191, %v75
    %v193 = vsel %vm88, %v192, 0.0
    %194 = vadd.xlane.f32.xlu0 %v193
    %v195 = vpop.xlane.xlu0 %194
    %v196 = vmul.f32 %v195, %v178
    %v197 = vld [vmem:[%s6] sm:$0x1]
    %v198 = vmul.f32 %v197, 0.1
    %v199 = vadd.f32 %v198, %v160
    %v200 = vld [vmem:[%s7] sm:$0x1]
    %v201 = vmul.f32 %v200, 0.1
    %v202 = vadd.f32 %v201, %v161
    %v203 = vld [vmem:[%s8] sm:$0x1]
    %v204 = vmul.f32 %v203, 0.1
    %v205 = vadd.f32 %v204, %v173
    %v206 = vld [vmem:[%s9] sm:$0xff]
    %v207 = vmul.f32 %v206, 0.1
    %v208 = vadd.f32 %v160, %v184
    %v209 = vsub.f32 %v72, %v208
    %v210 = vadd.f32 %v207, %v209
    %v211 = vld [vmem:[%s10] sm:$0xff]
    %v212 = vmul.f32 %v211, 0.1
    %v213 = vadd.f32 %v161, %v190
    %v214 = vsub.f32 %v73, %v213
    %v215 = vadd.f32 %v212, %v214
    %v216 = vld [vmem:[%s11] sm:$0xff]
    %v217 = vmul.f32 %v216, 0.1
    %v218 = vadd.f32 %v173, %v196
    %v219 = vsub.f32 %v156, %v218
    %v220 = vadd.f32 %v217, %v219
    %vm221 = vcmask 64512
    %v223 = vsel %vm221, %v76, 0
    %225 = vmatprep.subr.mxu0 0.0
    %226 = vmatpush1.msra.mxu0 0.0
    %227 = vmatprep.subr.mxu0 0.0
    %228 = vmatpush1.msra.mxu0 0.0
    %229 = vmatprep.subr.mxu0 0.0
    %230 = vmatpush1.msra.mxu0 0.0
    %231 = vmatprep.subr.mxu0 0.0
    %232 = vmatpush1.msra.mxu0 0.0
    %233 = vmatprep.subr.mxu0 0.0
    %234 = vmatpush1.msra.mxu0 0.0
    %235 = vmatprep.subr.mxu0 0.0
    %236 = vmatpush1.msra.mxu0 0.0
    %237 = vmatprep.subr.mxu0 0.0
    %238 = vmatpush1.msra.mxu0 0.0
    %239 = vmatprep.subr.mxu0 0.0
    %240 = vmatpush1.msra.mxu0 0.0
    %241 = vmatprep.subr.mxu0 0.0
    %242 = vmatpush1.msra.mxu0 0.0
    %243 = vmatprep.subr.mxu0 0.0
    %244 = vmatpush1.msra.mxu0 0.0
    %245 = vmatprep.subr.mxu0 0.0
    %246 = vmatpush1.msra.mxu0 0.0
    %247 = vmatprep.subr.mxu0 0.0
    %248 = vmatpush1.msra.mxu0 0.0
    %249 = vmatprep.subr.mxu0 0.0
    %250 = vmatpush1.msra.mxu0 0.0
    %251 = vmatprep.subr.mxu0 0.0
    %252 = vmatpush1.msra.mxu0 0.0
    %253 = vmatprep.subr.mxu0 0.0
    %254 = vmatpush1.msra.mxu0 0.0
    %255 = vmatprep.subr.mxu0 0.0
    %256 = vmatpush1.msra.mxu0 %v77
    %257 = vmatprep.subr.mxu0 0.0
    %258 = vmatpush2.msra.mxu0 0.0
    %259 = vmatprep.subr.mxu0 0.0
    %260 = vmatpush2.msra.mxu0 0.0
    %261 = vmatprep.subr.mxu0 0.0
    %262 = vmatpush2.msra.mxu0 0.0
    %263 = vmatprep.subr.mxu0 0.0
    %264 = vmatpush2.msra.mxu0 0.0
    %265 = vmatprep.subr.mxu0 0.0
    %266 = vmatpush2.msra.mxu0 0.0
    %267 = vmatprep.subr.mxu0 0.0
    %268 = vmatpush2.msra.mxu0 0.0
    %269 = vmatprep.subr.mxu0 0.0
    %270 = vmatpush2.msra.mxu0 0.0
    %271 = vmatprep.subr.mxu0 0.0
    %272 = vmatpush2.msra.mxu0 0.0
    %273 = vmatprep.subr.mxu0 0.0
    %274 = vmatpush2.msra.mxu0 0.0
    %275 = vmatprep.subr.mxu0 0.0
    %276 = vmatpush2.msra.mxu0 0.0
    %277 = vmatprep.subr.mxu0 0.0
    %278 = vmatpush2.msra.mxu0 0.0
    %279 = vmatprep.subr.mxu0 0.0
    %280 = vmatpush2.msra.mxu0 0.0
    %281 = vmatprep.subr.mxu0 0.0
    %282 = vmatpush2.msra.mxu0 0.0
    %283 = vmatprep.subr.mxu0 0.0
    %284 = vmatpush2.msra.mxu0 0.0
    %285 = vmatprep.subr.mxu0 0.0
    %286 = vmatpush2.msra.mxu0 0.0
    %287 = vmatprep.subr.mxu0 0.0
    %288 = vmatpush2.msra.mxu0 0.0
    %289 = vmatprep.mubr.f32.mxu0 0.0
    %290 = vmatmul.mubr.f32.gmra.mxu0 %v223
    %v291 = vpop.f32.mrf.mxu0
    %v292 = vadd.f32 0.0, %v291
    %v293 = vpop.f32.mrf.mxu0
    %294 = vdwg.mxu0
    %v295 = vmul.f32 %v292, 0.1
    %296 = vmatprep.subr.mxu0 0.0
    %297 = vmatpush1.msra.mxu0 0.0
    %298 = vmatprep.subr.mxu0 0.0
    %299 = vmatpush1.msra.mxu0 0.0
    %300 = vmatprep.subr.mxu0 0.0
    %301 = vmatpush1.msra.mxu0 0.0
    %302 = vmatprep.subr.mxu0 0.0
    %303 = vmatpush1.msra.mxu0 0.0
    %304 = vmatprep.subr.mxu0 0.0
    %305 = vmatpush1.msra.mxu0 0.0
    %306 = vmatprep.subr.mxu0 0.0
    %307 = vmatpush1.msra.mxu0 0.0
    %308 = vmatprep.subr.mxu0 0.0
    %309 = vmatpush1.msra.mxu0 0.0
    %310 = vmatprep.subr.mxu0 0.0
    %311 = vmatpush1.msra.mxu0 0.0
    %312 = vmatprep.subr.mxu0 0.0
    %313 = vmatpush1.msra.mxu0 0.0
    %314 = vmatprep.subr.mxu0 0.0
    %315 = vmatpush1.msra.mxu0 0.0
    %316 = vmatprep.subr.mxu0 0.0
    %317 = vmatpush1.msra.mxu0 0.0
    %318 = vmatprep.subr.mxu0 0.0
    %319 = vmatpush1.msra.mxu0 0.0
    %320 = vmatprep.subr.mxu0 0.0
    %321 = vmatpush1.msra.mxu0 0.0
    %322 = vmatprep.subr.mxu0 0.0
    %323 = vmatpush1.msra.mxu0 0.0
    %324 = vmatprep.subr.mxu0 0.0
    %325 = vmatpush1.msra.mxu0 0.0
    %326 = vmatprep.subr.mxu0 0.0
    %327 = vmatpush1.msra.mxu0 %v210
    %328 = vmatprep.subr.mxu0 0.0
    %329 = vmatpush2.msra.mxu0 0.0
    %330 = vmatprep.subr.mxu0 0.0
    %331 = vmatpush2.msra.mxu0 0.0
    %332 = vmatprep.subr.mxu0 0.0
    %333 = vmatpush2.msra.mxu0 0.0
    %334 = vmatprep.subr.mxu0 0.0
    %335 = vmatpush2.msra.mxu0 0.0
    %336 = vmatprep.subr.mxu0 0.0
    %337 = vmatpush2.msra.mxu0 0.0
    %338 = vmatprep.subr.mxu0 0.0
    %339 = vmatpush2.msra.mxu0 0.0
    %340 = vmatprep.subr.mxu0 0.0
    %341 = vmatpush2.msra.mxu0 0.0
    %342 = vmatprep.subr.mxu0 0.0
    %343 = vmatpush2.msra.mxu0 0.0
    %344 = vmatprep.subr.mxu0 0.0
    %345 = vmatpush2.msra.mxu0 0.0
    %346 = vmatprep.subr.mxu0 0.0
    %347 = vmatpush2.msra.mxu0 0.0
    %348 = vmatprep.subr.mxu0 0.0
    %349 = vmatpush2.msra.mxu0 0.0
    %350 = vmatprep.subr.mxu0 0.0
    %351 = vmatpush2.msra.mxu0 0.0
    %352 = vmatprep.subr.mxu0 0.0
    %353 = vmatpush2.msra.mxu0 0.0
    %354 = vmatprep.subr.mxu0 0.0
    %355 = vmatpush2.msra.mxu0 0.0
    %356 = vmatprep.subr.mxu0 0.0
    %357 = vmatpush2.msra.mxu0 0.0
    %358 = vmatprep.subr.mxu0 0.0
    %359 = vmatpush2.msra.mxu0 0.0
    %360 = vmatprep.mubr.f32.mxu0 0.0
    %361 = vmatmul.mubr.f32.gmra.mxu0 %v223
    %v362 = vpop.f32.mrf.mxu0
    %v363 = vadd.f32 0.0, %v362
    %v364 = vpop.f32.mrf.mxu0
    %365 = vdwg.mxu0
    %v367 = vlaneseq
    %v368 = vshrl.u32 %v367, 7
    %v369 = vsub.s32 0, %v368
    %v370 = vrot.slane %v199, %v369
    %v372 = vadd.f32 %v370, %v363
    %373 = vmatprep.subr.mxu0 0.0
    %374 = vmatpush1.msra.mxu0 0.0
    %375 = vmatprep.subr.mxu0 0.0
    %376 = vmatpush1.msra.mxu0 0.0
    %377 = vmatprep.subr.mxu0 0.0
    %378 = vmatpush1.msra.mxu0 0.0
    %379 = vmatprep.subr.mxu0 0.0
    %380 = vmatpush1.msra.mxu0 0.0
    %381 = vmatprep.subr.mxu0 0.0
    %382 = vmatpush1.msra.mxu0 0.0
    %383 = vmatprep.subr.mxu0 0.0
    %384 = vmatpush1.msra.mxu0 0.0
    %385 = vmatprep.subr.mxu0 0.0
    %386 = vmatpush1.msra.mxu0 0.0
    %387 = vmatprep.subr.mxu0 0.0
    %388 = vmatpush1.msra.mxu0 0.0
    %389 = vmatprep.subr.mxu0 0.0
    %390 = vmatpush1.msra.mxu0 0.0
    %391 = vmatprep.subr.mxu0 0.0
    %392 = vmatpush1.msra.mxu0 0.0
    %393 = vmatprep.subr.mxu0 0.0
    %394 = vmatpush1.msra.mxu0 0.0
    %395 = vmatprep.subr.mxu0 0.0
    %396 = vmatpush1.msra.mxu0 0.0
    %397 = vmatprep.subr.mxu0 0.0
    %398 = vmatpush1.msra.mxu0 0.0
    %399 = vmatprep.subr.mxu0 0.0
    %400 = vmatpush1.msra.mxu0 0.0
    %401 = vmatprep.subr.mxu0 0.0
    %402 = vmatpush1.msra.mxu0 0.0
    %403 = vmatprep.subr.mxu0 0.0
    %404 = vmatpush1.msra.mxu0 %v215
    %405 = vmatprep.subr.mxu0 0.0
    %406 = vmatpush2.msra.mxu0 0.0
    %407 = vmatprep.subr.mxu0 0.0
    %408 = vmatpush2.msra.mxu0 0.0
    %409 = vmatprep.subr.mxu0 0.0
    %410 = vmatpush2.msra.mxu0 0.0
    %411 = vmatprep.subr.mxu0 0.0
    %412 = vmatpush2.msra.mxu0 0.0
    %413 = vmatprep.subr.mxu0 0.0
    %414 = vmatpush2.msra.mxu0 0.0
    %415 = vmatprep.subr.mxu0 0.0
    %416 = vmatpush2.msra.mxu0 0.0
    %417 = vmatprep.subr.mxu0 0.0
    %418 = vmatpush2.msra.mxu0 0.0
    %419 = vmatprep.subr.mxu0 0.0
    %420 = vmatpush2.msra.mxu0 0.0
    %421 = vmatprep.subr.mxu0 0.0
    %422 = vmatpush2.msra.mxu0 0.0
    %423 = vmatprep.subr.mxu0 0.0
    %424 = vmatpush2.msra.mxu0 0.0
    %425 = vmatprep.subr.mxu0 0.0
    %426 = vmatpush2.msra.mxu0 0.0
    %427 = vmatprep.subr.mxu0 0.0
    %428 = vmatpush2.msra.mxu0 0.0
    %429 = vmatprep.subr.mxu0 0.0
    %430 = vmatpush2.msra.mxu0 0.0
    %431 = vmatprep.subr.mxu0 0.0
    %432 = vmatpush2.msra.mxu0 0.0
    %433 = vmatprep.subr.mxu0 0.0
    %434 = vmatpush2.msra.mxu0 0.0
    %435 = vmatprep.subr.mxu0 0.0
    %436 = vmatpush2.msra.mxu0 0.0
    %437 = vmatprep.mubr.f32.mxu0 0.0
    %438 = vmatmul.mubr.f32.gmra.mxu0 %v223
    %v439 = vpop.f32.mrf.mxu0
    %v440 = vadd.f32 0.0, %v439
    %v441 = vpop.f32.mrf.mxu0
    %442 = vdwg.mxu0
    %v444 = vlaneseq
    %v445 = vshrl.u32 %v444, 7
    %v446 = vsub.s32 0, %v445
    %v447 = vrot.slane %v202, %v446
    %v449 = vadd.f32 %v447, %v440
    %450 = vmatprep.subr.mxu0 0.0
    %451 = vmatpush1.msra.mxu0 0.0
    %452 = vmatprep.subr.mxu0 0.0
    %453 = vmatpush1.msra.mxu0 0.0
    %454 = vmatprep.subr.mxu0 0.0
    %455 = vmatpush1.msra.mxu0 0.0
    %456 = vmatprep.subr.mxu0 0.0
    %457 = vmatpush1.msra.mxu0 0.0
    %458 = vmatprep.subr.mxu0 0.0
    %459 = vmatpush1.msra.mxu0 0.0
    %460 = vmatprep.subr.mxu0 0.0
    %461 = vmatpush1.msra.mxu0 0.0
    %462 = vmatprep.subr.mxu0 0.0
    %463 = vmatpush1.msra.mxu0 0.0
    %464 = vmatprep.subr.mxu0 0.0
    %465 = vmatpush1.msra.mxu0 0.0
    %466 = vmatprep.subr.mxu0 0.0
    %467 = vmatpush1.msra.mxu0 0.0
    %468 = vmatprep.subr.mxu0 0.0
    %469 = vmatpush1.msra.mxu0 0.0
    %470 = vmatprep.subr.mxu0 0.0
    %471 = vmatpush1.msra.mxu0 0.0
    %472 = vmatprep.subr.mxu0 0.0
    %473 = vmatpush1.msra.mxu0 0.0
    %474 = vmatprep.subr.mxu0 0.0
    %475 = vmatpush1.msra.mxu0 0.0
    %476 = vmatprep.subr.mxu0 0.0
    %477 = vmatpush1.msra.mxu0 0.0
    %478 = vmatprep.subr.mxu0 0.0
    %479 = vmatpush1.msra.mxu0 0.0
    %480 = vmatprep.subr.mxu0 0.0
    %481 = vmatpush1.msra.mxu0 %v220
    %482 = vmatprep.subr.mxu0 0.0
    %483 = vmatpush2.msra.mxu0 0.0
    %484 = vmatprep.subr.mxu0 0.0
    %485 = vmatpush2.msra.mxu0 0.0
    %486 = vmatprep.subr.mxu0 0.0
    %487 = vmatpush2.msra.mxu0 0.0
    %488 = vmatprep.subr.mxu0 0.0
    %489 = vmatpush2.msra.mxu0 0.0
    %490 = vmatprep.subr.mxu0 0.0
    %491 = vmatpush2.msra.mxu0 0.0
    %492 = vmatprep.subr.mxu0 0.0
    %493 = vmatpush2.msra.mxu0 0.0
    %494 = vmatprep.subr.mxu0 0.0
    %495 = vmatpush2.msra.mxu0 0.0
    %496 = vmatprep.subr.mxu0 0.0
    %497 = vmatpush2.msra.mxu0 0.0
    %498 = vmatprep.subr.mxu0 0.0
    %499 = vmatpush2.msra.mxu0 0.0
    %500 = vmatprep.subr.mxu0 0.0
    %501 = vmatpush2.msra.mxu0 0.0
    %502 = vmatprep.subr.mxu0 0.0
    %503 = vmatpush2.msra.mxu0 0.0
    %504 = vmatprep.subr.mxu0 0.0
    %505 = vmatpush2.msra.mxu0 0.0
    %506 = vmatprep.subr.mxu0 0.0
    %507 = vmatpush2.msra.mxu0 0.0
    %508 = vmatprep.subr.mxu0 0.0
    %509 = vmatpush2.msra.mxu0 0.0
    %510 = vmatprep.subr.mxu0 0.0
    %511 = vmatpush2.msra.mxu0 0.0
    %512 = vmatprep.subr.mxu0 0.0
    %513 = vmatpush2.msra.mxu0 0.0
    %514 = vmatprep.mubr.f32.mxu0 0.0
    %515 = vmatmul.mubr.f32.gmra.mxu0 %v223
    %v516 = vpop.f32.mrf.mxu0
    %v517 = vadd.f32 0.0, %v516
    %v518 = vpop.f32.mrf.mxu0
    %519 = vdwg.mxu0
    %v521 = vlaneseq
    %v522 = vshrl.u32 %v521, 7
    %v523 = vsub.s32 0, %v522
    %v524 = vrot.slane %v205, %v523
    %v526 = vadd.f32 %v524, %v517
    %v527 = vand.u32 2147483647, %v295
    %vm528 = vcmp.le.f32.partialorder %v527, 0.7853982
    %vm529 = vcmp.lt.s32.totalorder %v295, 0
    %v530 = vand.u32 %v295, 2139095040
    %v531 = vshrl.u32 %v530, 23
    %v532 = vsub.s32 %v531, 127
    %v533 = vand.u32 2147483647, %v295
    %v534 = vand.u32 %v533, 8388607
    %v535 = vor.u32 %v534, 8388608
    %v536 = vsub.s32 0, %v535
    %v537 = vadd.s32 %v532, 1
    %vm538 = vcmp.gt.s32.totalorder %v537, 0
    %v539 = vsel %vm538, %v537, 0
    %v540 = vshrl.u32 %v539, 5
    %v541 = vand.u32 %v539, 31
    %v542 = vsub.s32 32, %v541
    %v543 = vshrl.u32 683565275, %v542
    %v544 = vshll.u32 683565275, %v541
    %v545 = vshrl.u32 2475754826, %v542
    %v546 = vor.u32 %v544, %v545
    %v547 = vshll.u32 2475754826, %v541
    %v548 = vshrl.u32 2131351028, %v542
    %v549 = vor.u32 %v547, %v548
    %v550 = vshll.u32 2131351028, %v541
    %v551 = vshrl.u32 2102212464, %v542
    %v552 = vor.u32 %v550, %v551
    %v553 = vshll.u32 2102212464, %v541
    %v554 = vshrl.u32 920167782, %v542
    %v555 = vor.u32 %v553, %v554
    %v556 = vshll.u32 920167782, %v541
    %v557 = vshrl.u32 1326507024, %v542
    %v558 = vor.u32 %v556, %v557
    %vm559 = vcmp.lt.s32.totalorder %v540, 1
    %vm560 = vcmp.lt.s32.totalorder %v540, 2
    %vm561 = vcmp.lt.s32.totalorder %v540, 3
    %vm562 = vcmp.lt.s32.totalorder %v540, 4
    %v563 = vsel %vm559, %v543, %v546
    %v564 = vsel %vm562, %v552, 2102212464
    %v565 = vsel %vm561, %v549, %v564
    %v566 = vsel %vm560, %v563, %v565
    %v567 = vsel %vm559, %v546, %v549
    %v568 = vsel %vm562, %v555, 920167782
    %v569 = vsel %vm561, %v552, %v568
    %v570 = vsel %vm560, %v567, %v569
    %v571 = vsel %vm559, %v549, %v552
    %v572 = vsel %vm562, %v558, 1326507024
    %v573 = vsel %vm561, %v555, %v572
    %v574 = vsel %vm560, %v571, %v573
    %v575 = vshll.u32 %v535, 8
    %v576 = vmul.u32.u64.compose %v575, %v574
    %v577 = vextract.low.u32 %v576
    %v578 = vextract.high.u32 %v576
    %v579 = vmul.u32.u64.compose %v575, %v570
    %v580 = vextract.low.u32 %v579
    %v581 = vextract.high.u32 %v579
    %v582 = vmul.u32 %v575, %v566
    %v583 = vadd.s32 %v578, %v580
    %vm584 = vc.u32 %v578, %v580
    %v585 = vadd.s32 %v581, 1
    %v586 = vsel %vm584, %v585, %v581
    %v587 = vadd.s32 %v582, %v586
    %v588 = vadd.s32 %v587, 536870912
    %v589 = vshrl.u32 %v588, 30
    %v590 = vshll.u32 %v589, 30
    %v591 = vsub.s32 %v587, %v590
    %vm592 = vcmp.lt.s32.totalorder %v591, 0
    %v593 = vsub.s32 0, %v591
    %v594 = vsel %vm592, %v593, %v591
    %v595 = vclz %v594
    %v596 = vsub.s32 %v595, 2
    %vm597 = vcmp.gt.s32.totalorder 0, %v596
    %v598 = vsel %vm597, 0, %v596
    %v599 = vsub.s32 32, %v598
    %v600 = vshll.u32 %v591, %v598
    %v601 = vshrl.u32 %v583, %v599
    %v602 = vor.u32 %v600, %v601
    %v603 = vsub.s32 4294967266, %v598
    %v604 = vadd.s32 %v603, 127
    %v605 = vshll.u32 %v604, 23
    %v606 = vor.u32 4788187, %v605
    %v607 = vand.u32 2147483647, %v606
    %v609 = vcvt.s32.f32 %v602
    %v610 = vmul.f32 %v609, %v607
    %v611 = vxor.u32 %v610, 2147483648
    %v612 = vsel %vm529, %v611, %v610
    %v613 = vsub.s32 4, %v589
    %v614 = vsel %vm529, %v613, %v589
    %v615 = vsel %vm528, %v295, %v612
    %v616 = vsel %vm528, 0, %v614
    %v617 = vcosq.f32.pop %v615
    %v618 = vsinq.f32.pop %v615
    %vm619 = vweird.f32 %v295
    %v620 = vand.u32 %v616, 3
    %vm621 = vcmp.lt.s32.totalorder %v620, 2
    %vm622 = vcmp.eq.s32.totalorder %v620, 0
    %v623 = vxor.u32 %v618, 2147483648
    %v624 = vsel %vm622, %v617, %v623
    %vm625 = vcmp.eq.s32.totalorder %v620, 2
    %v626 = vxor.u32 %v617, 2147483648
    %v627 = vsel %vm625, %v626, %v618
    %v628 = vsel %vm621, %v624, %v627
    %v629 = vsel %vm619, nan, %v628
    %v630 = vand.u32 2147483647, %v295
    %vm631 = vcmp.le.f32.partialorder %v630, 0.7853982
    %vm632 = vcmp.lt.s32.totalorder %v295, 0
    %v633 = vand.u32 %v295, 2139095040
    %v634 = vshrl.u32 %v633, 23
    %v635 = vsub.s32 %v634, 127
    %v636 = vand.u32 2147483647, %v295
    %v637 = vand.u32 %v636, 8388607
    %v638 = vor.u32 %v637, 8388608
    %v639 = vsub.s32 0, %v638
    %v640 = vadd.s32 %v635, 1
    %vm641 = vcmp.gt.s32.totalorder %v640, 0
    %v642 = vsel %vm641, %v640, 0
    %v643 = vshrl.u32 %v642, 5
    %v644 = vand.u32 %v642, 31
    %v645 = vsub.s32 32, %v644
    %v646 = vshrl.u32 683565275, %v645
    %v647 = vshll.u32 683565275, %v644
    %v648 = vshrl.u32 2475754826, %v645
    %v649 = vor.u32 %v647, %v648
    %v650 = vshll.u32 2475754826, %v644
    %v651 = vshrl.u32 2131351028, %v645
    %v652 = vor.u32 %v650, %v651
    %v653 = vshll.u32 2131351028, %v644
    %v654 = vshrl.u32 2102212464, %v645
    %v655 = vor.u32 %v653, %v654
    %v656 = vshll.u32 2102212464, %v644
    %v657 = vshrl.u32 920167782, %v645
    %v658 = vor.u32 %v656, %v657
    %v659 = vshll.u32 920167782, %v644
    %v660 = vshrl.u32 1326507024, %v645
    %v661 = vor.u32 %v659, %v660
    %vm662 = vcmp.lt.s32.totalorder %v643, 1
    %vm663 = vcmp.lt.s32.totalorder %v643, 2
    %vm664 = vcmp.lt.s32.totalorder %v643, 3
    %vm665 = vcmp.lt.s32.totalorder %v643, 4
    %v666 = vsel %vm662, %v646, %v649
    %v667 = vsel %vm665, %v655, 2102212464
    %v668 = vsel %vm664, %v652, %v667
    %v669 = vsel %vm663, %v666, %v668
    %v670 = vsel %vm662, %v649, %v652
    %v671 = vsel %vm665, %v658, 920167782
    %v672 = vsel %vm664, %v655, %v671
    %v673 = vsel %vm663, %v670, %v672
    %v674 = vsel %vm662, %v652, %v655
    %v675 = vsel %vm665, %v661, 1326507024
    %v676 = vsel %vm664, %v658, %v675
    %v677 = vsel %vm663, %v674, %v676
    %v678 = vshll.u32 %v638, 8
    %v679 = vmul.u32.u64.compose %v678, %v677
    %v680 = vextract.low.u32 %v679
    %v681 = vextract.high.u32 %v679
    %v682 = vmul.u32.u64.compose %v678, %v673
    %v683 = vextract.low.u32 %v682
    %v684 = vextract.high.u32 %v682
    %v685 = vmul.u32 %v678, %v669
    %v686 = vadd.s32 %v681, %v683
    %vm687 = vc.u32 %v681, %v683
    %v688 = vadd.s32 %v684, 1
    %v689 = vsel %vm687, %v688, %v684
    %v690 = vadd.s32 %v685, %v689
    %v691 = vadd.s32 %v690, 536870912
    %v692 = vshrl.u32 %v691, 30
    %v693 = vshll.u32 %v692, 30
    %v694 = vsub.s32 %v690, %v693
    %vm695 = vcmp.lt.s32.totalorder %v694, 0
    %v696 = vsub.s32 0, %v694
    %v697 = vsel %vm695, %v696, %v694
    %v698 = vclz %v697
    %v699 = vsub.s32 %v698, 2
    %vm700 = vcmp.gt.s32.totalorder 0, %v699
    %v701 = vsel %vm700, 0, %v699
    %v702 = vsub.s32 32, %v701
    %v703 = vshll.u32 %v694, %v701
    %v704 = vshrl.u32 %v686, %v702
    %v705 = vor.u32 %v703, %v704
    %v706 = vsub.s32 4294967266, %v701
    %v707 = vadd.s32 %v706, 127
    %v708 = vshll.u32 %v707, 23
    %v709 = vor.u32 4788187, %v708
    %v710 = vand.u32 2147483647, %v709
    %v712 = vcvt.s32.f32 %v705
    %v713 = vmul.f32 %v712, %v710
    %v714 = vxor.u32 %v713, 2147483648
    %v715 = vsel %vm632, %v714, %v713
    %v716 = vsub.s32 4, %v692
    %v717 = vsel %vm632, %v716, %v692
    %v718 = vsel %vm631, %v295, %v715
    %v719 = vsel %vm631, 0, %v717
    %v720 = vcosq.f32.pop %v718
    %v721 = vsinq.f32.pop %v718
    %vm722 = vweird.f32 %v295
    %v723 = vadd.s32 %v719, 3
    %v724 = vand.u32 %v723, 3
    %vm725 = vcmp.lt.s32.totalorder %v724, 2
    %vm726 = vcmp.eq.s32.totalorder %v724, 0
    %v727 = vxor.u32 %v721, 2147483648
    %v728 = vsel %vm726, %v720, %v727
    %vm729 = vcmp.eq.s32.totalorder %v724, 2
    %v730 = vxor.u32 %v720, 2147483648
    %v731 = vsel %vm729, %v730, %v721
    %v732 = vsel %vm725, %v728, %v731
    %v733 = vsel %vm722, nan, %v732
    %735 = vrot.lane.b32.xlu0 %v629, 1
    %v736 = vpop.permute.xlu0 %735
    %v738 = vmul.f32 %v629, %v736
    %740 = vrot.lane.b32.xlu0 %v733, 1
    %v741 = vpop.permute.xlu0 %740
    %v743 = vmul.f32 %v629, %v741
    %744 = vrot.lane.b32.xlu0 %v733, 2
    %v745 = vpop.permute.xlu0 %744
    %v747 = vmul.f32 %v743, %v745
    %748 = vrot.lane.b32.xlu0 %v629, 2
    %v749 = vpop.permute.xlu0 %748
    %v751 = vmul.f32 %v733, %v749
    %v752 = vsub.f32 %v747, %v751
    %v753 = vmul.f32 %v743, %v749
    %v754 = vmul.f32 %v733, %v745
    %v755 = vadd.f32 %v753, %v754
    %v756 = vmul.f32 %v733, %v736
    %v757 = vmul.f32 %v733, %v741
    %v758 = vmul.f32 %v757, %v745
    %v759 = vmul.f32 %v629, %v749
    %v760 = vadd.f32 %v758, %v759
    %v761 = vmul.f32 %v757, %v749
    %v762 = vmul.f32 %v629, %v745
    %v763 = vsub.f32 %v761, %v762
    %v764 = vsub.f32 0.0, %v733
    %v765 = vmul.f32 %v738, %v738
    %v766 = vmul.f32 %v752, %v756
    %v767 = vadd.f32 %v765, %v766
    %769 = vrot.lane.b32.xlu0 %v764, 1
    %v770 = vpop.permute.xlu0 %769
    %v772 = vmul.f32 %v755, %v770
    %v773 = vadd.f32 %v767, %v772
    %v774 = vmul.f32 %v738, %v752
    %v775 = vmul.f32 %v752, %v760
    %v776 = vadd.f32 %v774, %v775
    %778 = vrot.lane.b32.xlu0 %v743, 1
    %v779 = vpop.permute.xlu0 %778
    %v781 = vmul.f32 %v755, %v779
    %v782 = vadd.f32 %v776, %v781
    %v783 = vmul.f32 %v738, %v755
    %v784 = vmul.f32 %v752, %v763
    %v785 = vadd.f32 %v783, %v784
    %787 = vrot.lane.b32.xlu0 %v738, 1
    %v788 = vpop.permute.xlu0 %787
    %v790 = vmul.f32 %v755, %v788
    %v791 = vadd.f32 %v785, %v790
    %v792 = vmul.f32 %v756, %v738
    %v793 = vmul.f32 %v760, %v756
    %v794 = vadd.f32 %v792, %v793
    %v795 = vmul.f32 %v763, %v770
    %v796 = vadd.f32 %v794, %v795
    %v797 = vmul.f32 %v760, %v760
    %v798 = vadd.f32 %v766, %v797
    %v799 = vmul.f32 %v763, %v779
    %v800 = vadd.f32 %v798, %v799
    %v801 = vmul.f32 %v756, %v755
    %v802 = vmul.f32 %v760, %v763
    %v803 = vadd.f32 %v801, %v802
    %v804 = vmul.f32 %v763, %v788
    %v805 = vadd.f32 %v803, %v804
    %806 = vrot.lane.b32.xlu0 %v738, 127
    %v807 = vpop.permute.xlu0 %806
    %v809 = vmul.f32 %v764, %v807
    %811 = vrot.lane.b32.xlu0 %v756, 127
    %v812 = vpop.permute.xlu0 %811
    %v814 = vmul.f32 %v743, %v812
    %v815 = vadd.f32 %v809, %v814
    %v816 = vmul.f32 %v738, %v764
    %v817 = vadd.f32 %v815, %v816
    %819 = vrot.lane.b32.xlu0 %v752, 127
    %v820 = vpop.permute.xlu0 %819
    %v822 = vmul.f32 %v764, %v820
    %824 = vrot.lane.b32.xlu0 %v760, 127
    %v825 = vpop.permute.xlu0 %824
    %v827 = vmul.f32 %v743, %v825
    %v828 = vadd.f32 %v822, %v827
    %v829 = vmul.f32 %v738, %v743
    %v830 = vadd.f32 %v828, %v829
    %v831 = vadd.f32 %v772, %v799
    %833 = vrot.lane.b32.xlu0 %v765, 1
    %v834 = vpop.permute.xlu0 %833
    %v836 = vadd.f32 %v831, %v834
    %838 = vset.pattern.permute.xlu0 2
    %839 = vperm.xlu0 %838, %v773
    %v840 = vpop.permute.xlu0 %839
    %843 = vset.pattern.permute.xlu0 2
    %844 = vperm.xlu0 %843, %v782
    %v845 = vpop.permute.xlu0 %844
    %848 = vset.pattern.permute.xlu0 2
    %849 = vperm.xlu0 %848, %v791
    %v850 = vpop.permute.xlu0 %849
    %853 = vset.pattern.permute.xlu0 2
    %854 = vperm.xlu0 %853, %v796
    %v855 = vpop.permute.xlu0 %854
    %858 = vset.pattern.permute.xlu0 2
    %859 = vperm.xlu0 %858, %v800
    %v860 = vpop.permute.xlu0 %859
    %863 = vset.pattern.permute.xlu0 2
    %864 = vperm.xlu0 %863, %v805
    %v865 = vpop.permute.xlu0 %864
    %868 = vset.pattern.permute.xlu0 1
    %869 = vperm.xlu0 %868, %v817
    %v870 = vpop.permute.xlu0 %869
    %873 = vset.pattern.permute.xlu0 1
    %874 = vperm.xlu0 %873, %v830
    %v875 = vpop.permute.xlu0 %874
    %878 = vset.pattern.permute.xlu0 2
    %879 = vperm.xlu0 %878, %v836
    %v880 = vpop.permute.xlu0 %879
    %v883 = vlaneseq
    %v884 = vshrl.u32 %v883, 7
    %v885 = vsub.s32 0, %v884
    %v886 = vrot.slane %v79, %v885
    %887 = vset.pattern.permute.xlu0 0
    %888 = vperm.xlu0 %887, %v886
    %v889 = vpop.permute.xlu0 %888
    %v891 = vsub.f32 %v372, %v889
    %v893 = vlaneseq
    %v894 = vshrl.u32 %v893, 7
    %v895 = vsub.s32 0, %v894
    %v896 = vrot.slane %v81, %v895
    %897 = vset.pattern.permute.xlu0 0
    %898 = vperm.xlu0 %897, %v896
    %v899 = vpop.permute.xlu0 %898
    %v901 = vsub.f32 %v449, %v899
    %v903 = vlaneseq
    %v904 = vshrl.u32 %v903, 7
    %v905 = vsub.s32 0, %v904
    %v906 = vrot.slane %v83, %v905
    %907 = vset.pattern.permute.xlu0 0
    %908 = vperm.xlu0 %907, %v906
    %v909 = vpop.permute.xlu0 %908
    %v911 = vsub.f32 %v526, %v909
    %v912 = vmul.f32 %v840, %v891
    %v913 = vmul.f32 %v845, %v901
    %v914 = vadd.f32 %v912, %v913
    %v915 = vmul.f32 %v850, %v911
    %v916 = vadd.f32 %v914, %v915
    %v917 = vadd.f32 %v916, %v889
    %v918 = vmul.f32 %v855, %v891
    %v919 = vmul.f32 %v860, %v901
    %v920 = vadd.f32 %v918, %v919
    %v921 = vmul.f32 %v865, %v911
    %v922 = vadd.f32 %v920, %v921
    %v923 = vadd.f32 %v922, %v899
    %v924 = vmul.f32 %v870, %v891
    %v925 = vmul.f32 %v875, %v901
    %v926 = vadd.f32 %v924, %v925
    %v927 = vmul.f32 %v880, %v911
    %v928 = vadd.f32 %v926, %v927
    %v929 = vadd.f32 %v928, %v909
    %930 = vset.pattern.permute.xlu0 0
    %931 = vperm.xlu0 %930, %v79
    %v932 = vpop.permute.xlu0 %931
    %v934 = vlaneseq
    %v935 = vshrl.u32 %v934, 7
    %v936 = vsub.s32 0, %v935
    %v937 = vrot.slane %v932, %v936
    %v938 = vsub.f32 %v199, %v937
    %v940 = vlaneseq
    %v941 = vshrl.u32 %v940, 7
    %v942 = vsub.s32 0, %v941
    %v943 = vrot.slane %v938, %v942
    %945 = vset.pattern.permute.xlu0 0
    %946 = vperm.xlu0 %945, %v81
    %v947 = vpop.permute.xlu0 %946
    %v949 = vlaneseq
    %v950 = vshrl.u32 %v949, 7
    %v951 = vsub.s32 0, %v950
    %v952 = vrot.slane %v947, %v951
    %v953 = vsub.f32 %v202, %v952
    %v955 = vlaneseq
    %v956 = vshrl.u32 %v955, 7
    %v957 = vsub.s32 0, %v956
    %v958 = vrot.slane %v953, %v957
    %960 = vset.pattern.permute.xlu0 0
    %961 = vperm.xlu0 %960, %v83
    %v962 = vpop.permute.xlu0 %961
    %v964 = vlaneseq
    %v965 = vshrl.u32 %v964, 7
    %v966 = vsub.s32 0, %v965
    %v967 = vrot.slane %v962, %v966
    %v968 = vsub.f32 %v205, %v967
    %v970 = vlaneseq
    %v971 = vshrl.u32 %v970, 7
    %v972 = vsub.s32 0, %v971
    %v973 = vrot.slane %v968, %v972
    %v975 = vmul.f32 %v840, %v943
    %v976 = vmul.f32 %v845, %v958
    %v977 = vadd.f32 %v975, %v976
    %v978 = vmul.f32 %v850, %v973
    %v979 = vadd.f32 %v977, %v978
    %v980 = vadd.f32 %v979, %v889
    %v981 = vmul.f32 %v855, %v943
    %v982 = vmul.f32 %v860, %v958
    %v983 = vadd.f32 %v981, %v982
    %v984 = vmul.f32 %v865, %v973
    %v985 = vadd.f32 %v983, %v984
    %v986 = vadd.f32 %v985, %v899
    %v987 = vmul.f32 %v870, %v943
    %v988 = vmul.f32 %v875, %v958
    %v989 = vadd.f32 %v987, %v988
    %v990 = vmul.f32 %v880, %v973
    %v991 = vadd.f32 %v989, %v990
    %v992 = vadd.f32 %v991, %v909
    %993 = vst.msk [vmem:[#allocation6] sm:$0xff] %vm88, %v917
    %994 = vst.msk [vmem:[#allocation8] sm:$0xff] %vm88, %v923
    %995 = vst.msk [vmem:[#allocation10] sm:$0xff] %vm88, %v929
    %996 = vst.msk [vmem:[#allocation11] sm:$0xff] %vm88, %v980
    %997 = vst.msk [vmem:[#allocation13] sm:$0xff] %vm88, %v986
    %998 = vst.msk [vmem:[#allocation14] sm:$0xff] %vm88, %v992
    %v1000 = vrot.slane %v917, 7
    %v1002 = vsub.f32 %v917, %v1000
    %v1004 = vrot.slane %v923, 7
    %v1006 = vsub.f32 %v923, %v1004
    %v1008 = vrot.slane %v929, 7
    %v1010 = vsub.f32 %v929, %v1008
    %v1011 = vmul.f32 %v1002, %v1002
    %v1012 = vmul.f32 %v1006, %v1006
    %v1013 = vadd.f32 %v1011, %v1012
    %v1014 = vmul.f32 %v1010, %v1010
    %v1015 = vadd.f32 %v1013, %v1014
    %v1016 = vrsqrt.pop %v1015
    %v1017 = vmul.f32 %v1015, %v1016
    %vm1018 = vcmp.eq.f32.partialorder %v1015, inf
    %v1019 = vsel %vm1018, %v1015, %v1017
    %vm1020 = vcmp.eq.f32.partialorder %v1015, 0.0
    %v1021 = vand.u32 %v1015, 2147483648
    %v1022 = vsel %vm1020, %v1021, %v1019
    %v1024 = vrot.slane %v1022, 1
    %vm1026 = vcmask 129024
    %v1027 = vsel %vm1026, %v1024, 0.0
    %1028 = vadd.xlane.f32.xlu0 %v1027
    %v1029 = vpop.xlane.xlu0 %1028
    %v1030 = vrot.slane %v1029, 4
    %v1031 = vadd.f32 %v1029, %v1030
    %v1032 = vrot.slane %v1031, 2
    %v1033 = vadd.f32 %v1031, %v1032
    %v1034 = vrot.slane %v1033, 1
    %v1035 = vadd.f32 %v1033, %v1034
    %s1036 = vtos %v1035
    %v1037 = vstv %s1036
    %v1038 = vmul.f32 %v1037, 0.0078125
    %vm1039 = vcmask 0
    %1040 = vst.msk [vmem:[#allocation16] sm:$0x1] %vm1039, %v1038
    // Predicated region
    $region66: #{model_forward_pallas.1} parent=1 // pred_check
      _
    $region67: #{model_forward_pallas.1} parent=1 // pred_check_branch
      %1042 = sbr.rel (0) target = $region69
    $region68: #{model_forward_pallas.1} parent=1 // pred_region
      %s1044 = ssub.s32 128, 128
      %1045 = vsyncadd [#allocation7], %s1044
      %s1047 = sshll.u32 [#allocation6], 4
      %s1048 = int_to_ptr.vmem [resolvable:$true] %s1047
      %1050 = dma.vmem_to_hbm [thread:$0]  %s1048, 128, %s16, [#allocation7]
    $region69: #{model_forward_pallas.1} parent=1 // pred_fallthru
      _
    // Predicated region
    $region70: #{model_forward_pallas.1} parent=1 // pred_check
      _
    $region71: #{model_forward_pallas.1} parent=1 // pred_check_branch
      %1052 = sbr.rel (0) target = $region73
    $region72: #{model_forward_pallas.1} parent=1 // pred_region
      %s1054 = ssub.s32 128, 128
      %1055 = vsyncadd [#allocation9], %s1054
      %s1057 = sshll.u32 [#allocation8], 4
      %s1058 = int_to_ptr.vmem [resolvable:$true] %s1057
      %1060 = dma.vmem_to_hbm [thread:$0]  %s1058, 128, %s17, [#allocation9]
    $region73: #{model_forward_pallas.1} parent=1 // pred_fallthru
      _
    // Predicated region
    $region74: #{model_forward_pallas.1} parent=1 // pred_check
      _
    $region75: #{model_forward_pallas.1} parent=1 // pred_check_branch
      %1062 = sbr.rel (0) target = $region77
    $region76: #{model_forward_pallas.1} parent=1 // pred_region
      %s1064 = ssub.s32 128, 128
      %1065 = vsyncadd [#allocation9], %s1064
      %s1067 = sshll.u32 [#allocation10], 4
      %s1068 = int_to_ptr.vmem [resolvable:$true] %s1067
      %1070 = dma.vmem_to_hbm [thread:$0]  %s1068, 128, %s18, [#allocation9]
    $region77: #{model_forward_pallas.1} parent=1 // pred_fallthru
      _
    // Predicated region
    $region78: #{model_forward_pallas.1} parent=1 // pred_check
      _
    $region79: #{model_forward_pallas.1} parent=1 // pred_check_branch
      %1072 = sbr.rel (0) target = $region81
    $region80: #{model_forward_pallas.1} parent=1 // pred_region
      %s1074 = ssub.s32 128, 128
      %1075 = vsyncadd [#allocation12], %s1074
      %s1077 = sshll.u32 [#allocation11], 4
      %s1078 = int_to_ptr.vmem [resolvable:$true] %s1077
      %1080 = dma.vmem_to_hbm [thread:$0]  %s1078, 128, %s19, [#allocation12]
    $region81: #{model_forward_pallas.1} parent=1 // pred_fallthru
      _
    // Predicated region
    $region82: #{model_forward_pallas.1} parent=1 // pred_check
      _
    $region83: #{model_forward_pallas.1} parent=1 // pred_check_branch
      %1082 = sbr.rel (0) target = $region85
    $region84: #{model_forward_pallas.1} parent=1 // pred_region
      %s1084 = ssub.s32 128, 128
      %1085 = vsyncadd [#allocation12], %s1084
      %s1087 = sshll.u32 [#allocation13], 4
      %s1088 = int_to_ptr.vmem [resolvable:$true] %s1087
      %1090 = dma.vmem_to_hbm [thread:$0]  %s1088, 128, %s20, [#allocation12]
    $region85: #{model_forward_pallas.1} parent=1 // pred_fallthru
      _
    // Predicated region
    $region86: #{model_forward_pallas.1} parent=1 // pred_check
      _
    $region87: #{model_forward_pallas.1} parent=1 // pred_check_branch
      %1092 = sbr.rel (0) target = $region89
    $region88: #{model_forward_pallas.1} parent=1 // pred_region
      %s1094 = ssub.s32 128, 128
      %1095 = vsyncadd [#allocation15], %s1094
      %s1097 = sshll.u32 [#allocation14], 4
      %s1098 = int_to_ptr.vmem [resolvable:$true] %s1097
      %1100 = dma.vmem_to_hbm [thread:$0]  %s1098, 128, %s21, [#allocation15]
    $region89: #{model_forward_pallas.1} parent=1 // pred_fallthru
      _
    // Predicated region
    $region90: #{model_forward_pallas.1} parent=1 // pred_check
      _
    $region91: #{model_forward_pallas.1} parent=1 // pred_check_branch
      %1102 = sbr.rel (0) target = $region93
    $region92: #{model_forward_pallas.1} parent=1 // pred_region
      %s1104 = ssub.s32 16, 16
      %1105 = vsyncadd [#allocation15], %s1104
      %s1107 = sshll.u32 [#allocation16], 4
      %s1108 = int_to_ptr.vmem [resolvable:$true] %s1107
      %1110 = dma.vmem_to_hbm [thread:$0]  %s1108, 16, %s22, [#allocation15]
    $region93: #{model_forward_pallas.1} parent=1 // pred_fallthru
      _
    // Predicated region
    $region94: #{model_forward_pallas.1} parent=1 // pred_check
      _
    $region95: #{model_forward_pallas.1} parent=1 // pred_check_branch
      %1112 = sbr.rel (0) target = $region97
    $region96: #{model_forward_pallas.1} parent=1 // pred_region
      %1113 = dma.done [#allocation7], 128
    $region97: #{model_forward_pallas.1} parent=1 // pred_fallthru
      _
    // Predicated region
    $region98: #{model_forward_pallas.1} parent=1 // pred_check
      _
    $region99: #{model_forward_pallas.1} parent=1 // pred_check_branch
      %1115 = sbr.rel (0) target = $region101
    $region100: #{model_forward_pallas.1} parent=1 // pred_region
      %1116 = dma.done [#allocation9], 128
    $region101: #{model_forward_pallas.1} parent=1 // pred_fallthru
      _
    // Predicated region
    $region102: #{model_forward_pallas.1} parent=1 // pred_check
      _
    $region103: #{model_forward_pallas.1} parent=1 // pred_check_branch
      %1118 = sbr.rel (0) target = $region105
    $region104: #{model_forward_pallas.1} parent=1 // pred_region
      %1119 = dma.done [#allocation9], 128
    $region105: #{model_forward_pallas.1} parent=1 // pred_fallthru
      _
    // Predicated region
    $region106: #{model_forward_pallas.1} parent=1 // pred_check
      _
    $region107: #{model_forward_pallas.1} parent=1 // pred_check_branch
      %1121 = sbr.rel (0) target = $region109
    $region108: #{model_forward_pallas.1} parent=1 // pred_region
      %1122 = dma.done [#allocation12], 128
    $region109: #{model_forward_pallas.1} parent=1 // pred_fallthru
      _
    // Predicated region
    $region110: #{model_forward_pallas.1} parent=1 // pred_check
      _
    $region111: #{model_forward_pallas.1} parent=1 // pred_check_branch
      %1124 = sbr.rel (0) target = $region113
    $region112: #{model_forward_pallas.1} parent=1 // pred_region
      %1125 = dma.done [#allocation12], 128
    $region113: #{model_forward_pallas.1} parent=1 // pred_fallthru
      _
    // Predicated region
    $region114: #{model_forward_pallas.1} parent=1 // pred_check
      _
    $region115: #{model_forward_pallas.1} parent=1 // pred_check_branch
      %1127 = sbr.rel (0) target = $region117
    $region116: #{model_forward_pallas.1} parent=1 // pred_region
      %1128 = dma.done [#allocation15], 128
    $region117: #{model_forward_pallas.1} parent=1 // pred_fallthru
      _
    // Predicated region
    $region118: #{model_forward_pallas.1} parent=1 // pred_check
      _
    $region119: #{model_forward_pallas.1} parent=1 // pred_check_branch
      %1130 = sbr.rel (0) target = $region121
    $region120: #{model_forward_pallas.1} parent=1 // pred_region
      %1131 = dma.done [#allocation15], 16
    $region121: #{model_forward_pallas.1} parent=1 // pred_fallthru
      _
    %1132 = vsyncpa [#allocation7], 1
    %1133 = vsyncpa [#allocation9], 1
    %1134 = vsyncpa [#allocation12], 1
    %1135 = vsyncpa [#allocation15], 1

</llo_original>
